<compile_context>
chip_gen: v7x
topology: tpu7x:2x2x1
jax: 0.10.0
libtpu: 0.0.40
codegen_flags: <defaults>
</compile_context>

<pallas_src>
import math

import jax
import jax.numpy as jnp
from jax.experimental import pallas as pl
from jax.experimental.pallas import tpu as pltpu


# ----------------------------------------------------------------------------
# Fused Pallas kernel: video projection + pooling + L2 norm, spec pooling + L2
# ----------------------------------------------------------------------------
def clip_fused_pool_norm(frame_feat, stub_w, proj_w, proj_b, spec_feat, *, tk=512):
    """frame_feat: (B, T, Ks) f32   -- stub frame features (Ks tiny, e.g. 3)
       stub_w:     (Ks, C)   f32   -- synthetic backbone tail (TODO stub)
       proj_w:     (C, E)    f32   -- video_project_head = nn.Linear(2048, E)
       proj_b:     (E,)      f32
       spec_feat:  (B, T, Es) f32  -- Cnn14-stub output; spec head = Identity
       returns (video_features (B, E), spec_features (B, Es)), L2-normalized.
    """
    B, T, Ks = frame_feat.shape
    C, E = proj_w.shape
    Bs, Ts, Es = spec_feat.shape
    assert Bs == B and Ts == T
    BT = B * T

    tk = min(tk, C)
    assert C % tk == 0, "projection in-features must tile evenly over tk"
    n_k = C // tk

    # bf16 at the pallas_call boundary for the dominant weight read;
    # accumulation inside the kernel stays f32.
    frame2d = frame_feat.reshape(BT, Ks).astype(jnp.float32)     # tiny, keep f32
    stub_f32 = stub_w.astype(jnp.float32)                        # tiny, keep f32
    projw_bf = proj_w.astype(jnp.bfloat16)                       # 4 MiB -> 2 MiB
    bias2d = proj_b.reshape(1, E).astype(jnp.float32)

    def kernel(frame_ref, wstub_ref, w_ref, b_ref, spec_ref,
               video_out_ref, spec_out_ref, acc_ref):
        k = pl.program_id(0)

        @pl.when(k == 0)
        def _init():
            acc_ref[...] = jnp.zeros_like(acc_ref)

        # Stub-backbone tail for this K slab, done on the VPU (Ks == 3 is far
        # too small to be a useful MXU contraction):
        #   feat_tile[m, c] = sum_i frame[m, i] * wstub[i, c]
        frame = frame_ref[...]                                   # (BT, Ks) f32
        wstub = wstub_ref[...]                                   # (Ks, tk) f32
        feat_tile = frame[:, 0:1] * wstub[0:1, :]                # (BT, tk)
        for i in range(1, Ks):                                   # unrolled, Ks tiny
            feat_tile = feat_tile + frame[:, i:i + 1] * wstub[i:i + 1, :]

        # video_project_head slab: bf16 MXU matmul, f32 accumulation in VMEM.
        acc_ref[...] += jax.lax.dot_general(
            feat_tile.astype(jnp.bfloat16), w_ref[...],
            dimension_numbers=(((1,), (0,)), ((), ())),
            preferred_element_type=jnp.float32,
        )

        @pl.when(k == pl.num_programs(0) - 1)
        def _epilogue():
            def l2norm(x):
                # F.normalize(dim=-1), eps=1e-12  (rsqrt -> EUP slot)
                ss = jnp.sum(x * x, axis=-1, keepdims=True)
                return x * jax.lax.rsqrt(jnp.maximum(ss, 1e-24))

            # Video branch: bias + MaxPool1d(kernel_size=T) + normalize.
            proj = acc_ref[...] + b_ref[...]                     # (BT, E) f32
            proj = proj.reshape(B, T, E)                         # T=16: sublane-aligned view
            video_out_ref[...] = l2norm(jnp.max(proj, axis=1))   # (B, E)

            # Spec branch: Identity head + MaxPool1d(T) + normalize (fused here
            # to avoid a second pallas_call / HBM round trip).
            spec_max = jnp.max(spec_ref[...], axis=1)            # (B, Es)
            spec_out_ref[...] = l2norm(spec_max)

    flops = 2 * BT * Ks * C + 2 * BT * C * E
    bytes_accessed = (frame2d.size * 4 + stub_f32.size * 4 + projw_bf.size * 2
                      + bias2d.size * 4 + spec_feat.size * 4
                      + B * E * 4 + B * Es * 4)

    return pl.pallas_call(
        kernel,
        grid=(n_k,),
        in_specs=[
            pl.BlockSpec((BT, Ks), lambda k: (0, 0)),            # frame features
            pl.BlockSpec((Ks, tk), lambda k: (0, k)),            # stub tail slab
            pl.BlockSpec((tk, E), lambda k: (k, 0)),             # proj weight slab
            pl.BlockSpec((1, E), lambda k: (0, 0)),              # bias
            pl.BlockSpec((B, T, Es), lambda k: (0, 0, 0)),       # spec features
        ],
        out_specs=(
            pl.BlockSpec((B, E), lambda k: (0, 0)),
            pl.BlockSpec((B, Es), lambda k: (0, 0)),
        ),
        out_shape=(jax.ShapeDtypeStruct((B, E), jnp.float32),
                   jax.ShapeDtypeStruct((B, Es), jnp.float32)),
        scratch_shapes=[pltpu.VMEM((BT, E), jnp.float32)],       # f32 accumulator
        compiler_params=pltpu.CompilerParams(
            dimension_semantics=("arbitrary",),                  # K is a reduction
            vmem_limit_bytes=32 * 1024 * 1024),
        cost_estimate=pl.CostEstimate(
            flops=flops, transcendentals=2 * B,
            bytes_accessed=bytes_accessed),
    )(frame2d, stub_f32, projw_bf, bias2d, spec_feat)


# ----------------------------------------------------------------------------
# Deterministic synthetic backbone stubs (plain JAX glue)
# ----------------------------------------------------------------------------
def video_encoder_stub_head(video):
    # TODO(synk): ResNet3dSlowOnly (3D-conv backbone) has no compact Pallas
    # equivalent; replaced by a deterministic spatial mean whose (3 -> 2048)
    # linear tail is fused into the Pallas kernel above.
    return jnp.mean(video, axis=(3, 4))                          # (B, T, 3)


def spec_encoder_stub(spec, w_stub):
    # TODO(synk): Cnn14 audio backbone replaced by a deterministic
    # segment-mean + linear stub producing the (B, 16, 512) features that
    # encode_spec()'s 'cnn14_pool' path expects (project head = Identity).
    B, Ts, F = spec.shape
    seg = Ts // 16
    seg_feat = jnp.mean(spec.reshape(B, 16, seg, F), axis=2)     # (B, 16, F)
    return jnp.dot(seg_feat, w_stub)                             # (B, 16, 512)


# ----------------------------------------------------------------------------
# Full module forward (CLIP_Video_Spec.forward, output_dict=True path)
# ----------------------------------------------------------------------------
def clip_video_spec_forward(params, video, spec):
    # encode_video ('Slowonly_pool'): encoder -> Linear(2048,E) -> MaxPool1d(16)
    # -> F.normalize.  The projection/pool/normalize run in the Pallas kernel.
    frame_feat = video_encoder_stub_head(video)                  # (B, T, 3)

    # encode_spec ('cnn14_pool'): encoder -> Identity -> MaxPool1d(16)
    # -> F.normalize.  Pool+normalize are fused into the same Pallas kernel.
    spec_feat = spec_encoder_stub(spec, params["spec_stub_w"])   # (B, 16, 512)

    video_features, spec_features = clip_fused_pool_norm(
        frame_feat, params["video_stub_w"], params["video_proj_w"],
        params["video_proj_b"], spec_feat)

    return {
        "image_features": video_features,                        # normalized video feats
        "text_features": spec_features,                          # normalized spec feats
        "logit_scale": jnp.exp(params["logit_scale"]),
    }


# ----------------------------------------------------------------------------
# Main
# ----------------------------------------------------------------------------
if __name__ == "__main__":
    key = jax.random.PRNGKey(0)
    k_vid, k_spec, k_vstub, k_sstub, k_pw, k_pb = jax.random.split(key, 6)

    B = 2
    T = 16            # MaxPool1d kernel_size = 16 -> 16 time steps
    VID_C = 2048      # ResNet3dSlowOnly output channels
    EMBED = 512       # embed_dim
    SPEC_C = 512      # Cnn14(embed_dim=512) output channels

    # Module inputs (small spatial/mel sizes).
    video = jax.random.normal(k_vid, (B, T, 3, 16, 16), dtype=jnp.float32)
    spec = jax.random.normal(k_spec, (B, 64, 64), dtype=jnp.float32)

    params = {
        # synthetic backbone stubs
        "video_stub_w": jax.random.normal(k_vstub, (3, VID_C), jnp.float32) * 0.1,
        "spec_stub_w": jax.random.normal(k_sstub, (64, SPEC_C), jnp.float32) * 0.1,
        # video_project_head = nn.Linear(2048, embed_dim)
        "video_proj_w": jax.random.normal(k_pw, (VID_C, EMBED), jnp.float32)
                        * (1.0 / math.sqrt(VID_C)),
        "video_proj_b": jax.random.normal(k_pb, (EMBED,), jnp.float32) * 0.01,
        # logit_scale = log(1/0.07)
        "logit_scale": jnp.asarray(math.log(1.0 / 0.07), dtype=jnp.float32),
    }

    out = jax.jit(clip_video_spec_forward)(params, video, spec)
    out = jax.block_until_ready(out)

    # light sanity checks: correct shapes, unit-norm features
    assert out["image_features"].shape == (B, EMBED)
    assert out["text_features"].shape == (B, SPEC_C)
    assert jnp.allclose(
        jnp.linalg.norm(out["image_features"], axis=-1), 1.0, atol=1e-4)
    assert jnp.allclose(
        jnp.linalg.norm(out["text_features"], axis=-1), 1.0, atol=1e-4)
    assert jnp.isfinite(out["logit_scale"])

    print("KERNEL_OK")
</pallas_src>

<mosaic_0001>
module attributes {stable_mosaic.version = 11 : i64} {
  func.func @kernel(%arg0: i32, %arg1: memref<32x3xf32, #tpu.memory_space<vmem>>, %arg2: memref<3x512xf32, #tpu.memory_space<vmem>>, %arg3: memref<512x512xbf16, #tpu.memory_space<vmem>>, %arg4: memref<1x512xf32, #tpu.memory_space<vmem>>, %arg5: memref<2x16x512xf32, #tpu.memory_space<vmem>>, %arg6: memref<2x512xf32, #tpu.memory_space<vmem>>, %arg7: memref<2x512xf32, #tpu.memory_space<vmem>>, %arg8: memref<32x512xf32, #tpu.memory_space<vmem>>) attributes {dimension_semantics = [#tpu.dimension_semantics<arbitrary>], iteration_bounds = array<i64: 4>, scalar_prefetch = 0 : i64, scratch_operands = 1 : i64, tpu.core_type = #tpu.core_type<tc>, window_params = [{pipeline_mode = #tpu.pipeline_mode<synchronous>, transform_indices = @transform_0, window_bounds = array<i64: 32, 3>}, {transform_indices = @transform_1, window_bounds = array<i64: 3, 512>}, {transform_indices = @transform_2, window_bounds = array<i64: 512, 512>}, {pipeline_mode = #tpu.pipeline_mode<synchronous>, transform_indices = @transform_3, window_bounds = array<i64: 1, 512>}, {pipeline_mode = #tpu.pipeline_mode<synchronous>, transform_indices = @transform_4, window_bounds = array<i64: 2, 16, 512>}, {pipeline_mode = #tpu.pipeline_mode<synchronous>, transform_indices = @transform_5, window_bounds = array<i64: 2, 512>}, {pipeline_mode = #tpu.pipeline_mode<synchronous>, transform_indices = @transform_6, window_bounds = array<i64: 2, 512>}]} {
    %c0_i32 = arith.constant 0 : i32
    %0 = arith.cmpi eq, %arg0, %c0_i32 : i32
    %1 = arith.extui %0 : i1 to i32
    %c0_i32_0 = arith.constant 0 : i32
    %2 = arith.cmpi ne, %1, %c0_i32_0 : i32
    scf.if %2 {
      %cst_11 = arith.constant 0.000000e+00 : f32
      %31 = vector.broadcast %cst_11 : f32 to vector<32x512xf32>
      %c0_12 = arith.constant 0 : index
      %c0_13 = arith.constant 0 : index
      %32 = vector.load %arg8[%c0_12, %c0_13] : memref<32x512xf32, #tpu.memory_space<vmem>>, vector<32x512xf32>
      tpu.vector_store %arg8[%c0_12, %c0_13], %31 {strides = array<i32>} : memref<32x512xf32, #tpu.memory_space<vmem>>, vector<32x512xf32>,
    } else {
    }
    %c0 = arith.constant 0 : index
    %c0_1 = arith.constant 0 : index
    %3 = vector.load %arg1[%c0, %c0_1] : memref<32x3xf32, #tpu.memory_space<vmem>>, vector<32x3xf32>
    %c0_2 = arith.constant 0 : index
    %c0_3 = arith.constant 0 : index
    %4 = vector.load %arg2[%c0_2, %c0_3] : memref<3x512xf32, #tpu.memory_space<vmem>>, vector<3x512xf32>
    %5 = vector.extract_strided_slice %3 {offsets = [0, 0], sizes = [32, 1], strides = [1, 1]} : vector<32x3xf32> to vector<32x1xf32>
    %6 = vector.extract_strided_slice %4 {offsets = [0, 0], sizes = [1, 512], strides = [1, 1]} : vector<3x512xf32> to vector<1x512xf32>
    %7 = vector.broadcast %5 : vector<32x1xf32> to vector<32x512xf32>
    %8 = vector.broadcast %6 : vector<1x512xf32> to vector<32x512xf32>
    %9 = arith.mulf %7, %8 : vector<32x512xf32>
    %10 = vector.extract_strided_slice %3 {offsets = [0, 1], sizes = [32, 1], strides = [1, 1]} : vector<32x3xf32> to vector<32x1xf32>
    %11 = vector.extract_strided_slice %4 {offsets = [1, 0], sizes = [1, 512], strides = [1, 1]} : vector<3x512xf32> to vector<1x512xf32>
    %12 = vector.broadcast %10 : vector<32x1xf32> to vector<32x512xf32>
    %13 = vector.broadcast %11 : vector<1x512xf32> to vector<32x512xf32>
    %14 = arith.mulf %12, %13 : vector<32x512xf32>
    %15 = arith.addf %9, %14 : vector<32x512xf32>
    %16 = vector.extract_strided_slice %3 {offsets = [0, 2], sizes = [32, 1], strides = [1, 1]} : vector<32x3xf32> to vector<32x1xf32>
    %17 = vector.extract_strided_slice %4 {offsets = [2, 0], sizes = [1, 512], strides = [1, 1]} : vector<3x512xf32> to vector<1x512xf32>
    %18 = vector.broadcast %16 : vector<32x1xf32> to vector<32x512xf32>
    %19 = vector.broadcast %17 : vector<1x512xf32> to vector<32x512xf32>
    %20 = arith.mulf %18, %19 : vector<32x512xf32>
    %21 = arith.addf %15, %20 : vector<32x512xf32>
    %c0_4 = arith.constant 0 : index
    %c0_5 = arith.constant 0 : index
    %22 = vector.load %arg8[%c0_4, %c0_5] : memref<32x512xf32, #tpu.memory_space<vmem>>, vector<32x512xf32>
    %23 = arith.truncf %21 : vector<32x512xf32> to vector<32x512xbf16>
    %c0_6 = arith.constant 0 : index
    %c0_7 = arith.constant 0 : index
    %24 = vector.load %arg3[%c0_6, %c0_7] : memref<512x512xbf16, #tpu.memory_space<vmem>>, vector<512x512xbf16>
    %cst = arith.constant dense<0.000000e+00> : vector<32x512xf32>
    %25 = tpu.matmul %23, %24, %cst {dimension_numbers = #tpu.dot_dimension_numbers<[1], [0], [0], [1], [0, 0, 1, 1], [], []>} : vector<32x512xbf16>, vector<512x512xbf16>, vector<32x512xf32> -> vector<32x512xf32>
    %26 = arith.addf %22, %25 : vector<32x512xf32>
    %c0_8 = arith.constant 0 : index
    %c0_9 = arith.constant 0 : index
    %27 = vector.load %arg8[%c0_8, %c0_9] : memref<32x512xf32, #tpu.memory_space<vmem>>, vector<32x512xf32>
    tpu.vector_store %arg8[%c0_8, %c0_9], %26 {strides = array<i32>} : memref<32x512xf32, #tpu.memory_space<vmem>>, vector<32x512xf32>,
    %c3_i32 = arith.constant 3 : i32
    %28 = arith.cmpi eq, %arg0, %c3_i32 : i32
    %29 = arith.extui %28 : i1 to i32
    %c0_i32_10 = arith.constant 0 : i32
    %30 = arith.cmpi ne, %29, %c0_i32_10 : i32
    scf.if %30 {
      %c0_11 = arith.constant 0 : index
      %c0_12 = arith.constant 0 : index
      %31 = vector.load %arg8[%c0_11, %c0_12] : memref<32x512xf32, #tpu.memory_space<vmem>>, vector<32x512xf32>
      %c0_13 = arith.constant 0 : index
      %c0_14 = arith.constant 0 : index
      %32 = vector.load %arg4[%c0_13, %c0_14] : memref<1x512xf32, #tpu.memory_space<vmem>>, vector<1x512xf32>
      %33 = vector.broadcast %32 : vector<1x512xf32> to vector<32x512xf32>
      %34 = arith.addf %31, %33 : vector<32x512xf32>
      %35 = vector.shape_cast %34 : vector<32x512xf32> to vector<2x16x512xf32>
      %cst_15 = arith.constant dense<0xFF800000> : vector<2x512xf32>
      %36 = vector.multi_reduction <maximumf>, %35, %cst_15 [1] : vector<2x16x512xf32> to vector<2x512xf32>
      %37 = arith.mulf %36, %36 : vector<2x512xf32>
      %cst_16 = arith.constant dense<0.000000e+00> : vector<2xf32>
      %38 = vector.multi_reduction <add>, %37, %cst_16 [1] : vector<2x512xf32> to vector<2xf32>
      %39 = vector.shape_cast %38 : vector<2xf32> to vector<2x1xf32>
      %cst_17 = arith.constant 1.000000e-24 : f32
      %40 = vector.broadcast %cst_17 : f32 to vector<2x1xf32>
      %41 = arith.maximumf %39, %40 : vector<2x1xf32>
      %42 = math.rsqrt %41 : vector<2x1xf32>
      %43 = vector.broadcast %42 : vector<2x1xf32> to vector<2x512xf32>
      %44 = arith.mulf %36, %43 : vector<2x512xf32>
      %c0_18 = arith.constant 0 : index
      %c0_19 = arith.constant 0 : index
      %45 = vector.load %arg6[%c0_18, %c0_19] : memref<2x512xf32, #tpu.memory_space<vmem>>, vector<2x512xf32>
      tpu.vector_store %arg6[%c0_18, %c0_19], %44 {strides = array<i32>} : memref<2x512xf32, #tpu.memory_space<vmem>>, vector<2x512xf32>,
      %c0_20 = arith.constant 0 : index
      %c0_21 = arith.constant 0 : index
      %c0_22 = arith.constant 0 : index
      %46 = vector.load %arg5[%c0_20, %c0_21, %c0_22] : memref<2x16x512xf32, #tpu.memory_space<vmem>>, vector<2x16x512xf32>
      %cst_23 = arith.constant dense<0xFF800000> : vector<2x512xf32>
      %47 = vector.multi_reduction <maximumf>, %46, %cst_23 [1] : vector<2x16x512xf32> to vector<2x512xf32>
      %48 = arith.mulf %47, %47 : vector<2x512xf32>
      %cst_24 = arith.constant dense<0.000000e+00> : vector<2xf32>
      %49 = vector.multi_reduction <add>, %48, %cst_24 [1] : vector<2x512xf32> to vector<2xf32>
      %50 = vector.shape_cast %49 : vector<2xf32> to vector<2x1xf32>
      %cst_25 = arith.constant 1.000000e-24 : f32
      %51 = vector.broadcast %cst_25 : f32 to vector<2x1xf32>
      %52 = arith.maximumf %50, %51 : vector<2x1xf32>
      %53 = math.rsqrt %52 : vector<2x1xf32>
      %54 = vector.broadcast %53 : vector<2x1xf32> to vector<2x512xf32>
      %55 = arith.mulf %47, %54 : vector<2x512xf32>
      %c0_26 = arith.constant 0 : index
      %c0_27 = arith.constant 0 : index
      %56 = vector.load %arg7[%c0_26, %c0_27] : memref<2x512xf32, #tpu.memory_space<vmem>>, vector<2x512xf32>
      tpu.vector_store %arg7[%c0_26, %c0_27], %55 {strides = array<i32>} : memref<2x512xf32, #tpu.memory_space<vmem>>, vector<2x512xf32>,
    } else {
    }
    return
  }
  func.func @transform_0(%arg0: i32) -> (i32, i32) {
    %c0_i32 = arith.constant 0 : i32
    %c0_i32_0 = arith.constant 0 : i32
    %c0_i32_1 = arith.constant 0 : i32
    return %c0_i32, %c0_i32_0 : i32, i32
  }
  func.func @transform_1(%arg0: i32) -> (i32, i32) {
    %c0_i32 = arith.constant 0 : i32
    %c0_i32_0 = arith.constant 0 : i32
    return %c0_i32, %arg0 : i32, i32
  }
  func.func @transform_2(%arg0: i32) -> (i32, i32) {
    %c0_i32 = arith.constant 0 : i32
    %c0_i32_0 = arith.constant 0 : i32
    return %arg0, %c0_i32 : i32, i32
  }
  func.func @transform_3(%arg0: i32) -> (i32, i32) {
    %c0_i32 = arith.constant 0 : i32
    %c0_i32_0 = arith.constant 0 : i32
    %c0_i32_1 = arith.constant 0 : i32
    return %c0_i32, %c0_i32_0 : i32, i32
  }
  func.func @transform_4(%arg0: i32) -> (i32, i32, i32) {
    %c0_i32 = arith.constant 0 : i32
    %c0_i32_0 = arith.constant 0 : i32
    %c0_i32_1 = arith.constant 0 : i32
    %c0_i32_2 = arith.constant 0 : i32
    return %c0_i32, %c0_i32_0, %c0_i32_1 : i32, i32, i32
  }
  func.func @transform_5(%arg0: i32) -> (i32, i32) {
    %c0_i32 = arith.constant 0 : i32
    %c0_i32_0 = arith.constant 0 : i32
    %c0_i32_1 = arith.constant 0 : i32
    return %c0_i32, %c0_i32_0 : i32, i32
  }
  func.func @transform_6(%arg0: i32) -> (i32, i32) {
    %c0_i32 = arith.constant 0 : i32
    %c0_i32_0 = arith.constant 0 : i32
    %c0_i32_1 = arith.constant 0 : i32
    return %c0_i32, %c0_i32_0 : i32, i32
  }
}

</mosaic_0001>

<llo_original>
// kernel: clip_video_spec_forward.1
$region0: #{clip_video_spec_forward.1}
  #allocation0 [shape = 'u32[]', space=smem, size = 0x4, offset = 0x4, fixed_abs, tag = 'smem constant byte address 0x4 - core index']
  #allocation1 [shape = 'u32[144,128]{1,0:T(1,128)}', space=vmem, size = 0x12000, scoped, tag = 'internal scratch']
  #allocation2 [shape = 'f32[32,512]{1,0:T(8,128)}', space=vmem, size = 0x10000, scoped, tag = 'scratch operand']
  %s0 = inlined_call_operand.vmem [shape: f32[32,3], index: 0, kind: input, shape index: {}]
  %s1 = inlined_call_operand.vmem [shape: f32[3,2048], index: 1, kind: input, shape index: {}]
  %s2 = inlined_call_operand.vmem [shape: bf16[2048,512], index: 2, kind: input, shape index: {}]
  %s3 = inlined_call_operand.vmem [shape: f32[1,512], index: 3, kind: input, shape index: {}]
  %s4 = inlined_call_operand.vmem [shape: f32[2,16,512], index: 4, kind: input, shape index: {}]
  %s5 = inlined_call_operand.hbm [shape: f32[2,512], index: 5, kind: output, shape index: {0}]
  %s6 = inlined_call_operand.hbm [shape: f32[2,512], index: 6, kind: output, shape index: {1}]
  %7 = xla_tuple %s5, %s6
  %s8 = sld [smem:[#allocation0]]
  $region69: #{clip_video_spec_forward.1} parent=0
    _
  %s10 = ssub.s32 1, %s8
  %s11 = scalar_select 0, %s10, %s8
  $region1: #{clip_video_spec_forward.1} parent=0
    #allocation3 [shape = 'u8[4096]{0}', space=vmem, size = 0x1000, scoped, tag = 'output window, operand 0, single buffered']
    #allocation4 [shape = 's32[2]{0}', space=sflag, size = 0x8, scoped, tag = 'scoped memory for clip_video_spec_forward.1']
    #allocation5 [shape = 'u8[4096]{0}', space=vmem, size = 0x1000, scoped, tag = 'output window, operand 1, single buffered']
    #allocation6 [shape = 's32[1]{0}', space=sflag, size = 0x4, scoped, tag = 'scoped memory for clip_video_spec_forward.1']
    %12 = vsyncpa [#allocation4], 0
    %13 = vsyncpa [#allocation6], 0
    loop: start=0, step=1, limit=6
    $region2: #{clip_video_spec_forward.1} parent=1 // loop_pre_header
      _
    $region3: #{clip_video_spec_forward.1} parent=1 // loop_header
      %s15 = sphi 0, %s19
      %p16 = scmp.ge.s32.totalorder %s15, 6
      %s23 = sphi 0, %s23
      %s25 = sphi 0, %s23
      %s26 = sphi 0, %s25
      %s40 = sphi 0, %s26
      %s46 = sphi 0, %s48
      %s49 = sphi 0, %s46
      %s50 = sphi 0, %s49
      %s66 = sphi 0, %s50
      %s72 = sphi 0, %s74
      %s75 = sphi 0, %s72
      %s76 = sphi 0, %s75
      %s92 = sphi 0, %s76
      %s96 = sphi 0, %s96
      %s98 = sphi 0, %s96
      %s99 = sphi 0, %s98
      %s113 = sphi 0, %s99
      %s117 = sphi 0, %s117
      %s119 = sphi 0, %s117
      %s120 = sphi 0, %s119
      %s134 = sphi 0, %s120
      %s138 = sphi 0, %s138
      %s140 = sphi 0, %s138
      %s141 = sphi 0, %s140
      %s155 = sphi 0, %s141
      %s159 = sphi 0, %s159
      %s161 = sphi 0, %s159
      %s162 = sphi 0, %s161
      %s176 = sphi 0, %s162
    $region4: #{clip_video_spec_forward.1} parent=1 // loop_header_branch
      %18 = sbr.rel (%p16) target = $region8
    $region5: #{clip_video_spec_forward.1} parent=1 // loop_body
      %s20 = ssub.s32 %s15, 1
      %s21 = ssub.s32 %s15, 2
      %s22 = sadd.s32 %s15, 1
      %s24 = sadd.s32 %s23, 1
      %p27 = scmp.eq.s32.totalorder %s15, 3
      %p28 = scmp.ne.s32.totalorder %s23, %s25
      %p29 = scmp.eq.s32.totalorder %s15, 0
      %p30 = por %p28, %p29
      %p31 = scmp.ne.s32.totalorder %s23, %s25
      %p32 = scmp.eq.s32.totalorder %s20, 3
      %p33 = por %p31, %p32
      %p34 = scmp.ne.s32.totalorder %s25, %s26
      %p35 = scmp.eq.s32.totalorder %s20, 0
      %p36 = por %p34, %p35
      %p37 = scmp.ne.s32.totalorder %s25, %s26
      %p38 = scmp.eq.s32.totalorder %s21, 3
      %p39 = por %p37, %p38
      %p41 = scmp.ne.s32.totalorder %s26, %s40
      %p42 = scmp.eq.s32.totalorder %s21, 0
      %p43 = por %p41, %p42
      %s44 = ssub.s32 %s15, %s22
      %p45 = scmp.eq.s32.totalorder %s44, 0
      %s47 = sadd.s32 %s46, 1
      %s48 = scalar_select %p45, %s46, %s47
      %p51 = pneg %p45
      %p52 = scmp.eq.s32.totalorder %s15, 3
      %p53 = por %p51, %p52
      %p54 = scmp.ne.s32.totalorder %s46, %s49
      %p55 = scmp.eq.s32.totalorder %s15, 0
      %p56 = por %p54, %p55
      %p57 = scmp.ne.s32.totalorder %s46, %s49
      %p58 = scmp.eq.s32.totalorder %s20, 3
      %p59 = por %p57, %p58
      %p60 = scmp.ne.s32.totalorder %s49, %s50
      %p61 = scmp.eq.s32.totalorder %s20, 0
      %p62 = por %p60, %p61
      %p63 = scmp.ne.s32.totalorder %s49, %s50
      %p64 = scmp.eq.s32.totalorder %s21, 3
      %p65 = por %p63, %p64
      %p67 = scmp.ne.s32.totalorder %s50, %s66
      %p68 = scmp.eq.s32.totalorder %s21, 0
      %p69 = por %p67, %p68
      %s70 = ssub.s32 %s15, %s22
      %p71 = scmp.eq.s32.totalorder %s70, 0
      %s73 = sadd.s32 %s72, 1
      %s74 = scalar_select %p71, %s72, %s73
      %p77 = pneg %p71
      %p78 = scmp.eq.s32.totalorder %s15, 3
      %p79 = por %p77, %p78
      %p80 = scmp.ne.s32.totalorder %s72, %s75
      %p81 = scmp.eq.s32.totalorder %s15, 0
      %p82 = por %p80, %p81
      %p83 = scmp.ne.s32.totalorder %s72, %s75
      %p84 = scmp.eq.s32.totalorder %s20, 3
      %p85 = por %p83, %p84
      %p86 = scmp.ne.s32.totalorder %s75, %s76
      %p87 = scmp.eq.s32.totalorder %s20, 0
      %p88 = por %p86, %p87
      %p89 = scmp.ne.s32.totalorder %s75, %s76
      %p90 = scmp.eq.s32.totalorder %s21, 3
      %p91 = por %p89, %p90
      %p93 = scmp.ne.s32.totalorder %s76, %s92
      %p94 = scmp.eq.s32.totalorder %s21, 0
      %p95 = por %p93, %p94
      %s97 = sadd.s32 %s96, 1
      %p100 = scmp.eq.s32.totalorder %s15, 3
      %p101 = scmp.ne.s32.totalorder %s96, %s98
      %p102 = scmp.eq.s32.totalorder %s15, 0
      %p103 = por %p101, %p102
      %p104 = scmp.ne.s32.totalorder %s96, %s98
      %p105 = scmp.eq.s32.totalorder %s20, 3
      %p106 = por %p104, %p105
      %p107 = scmp.ne.s32.totalorder %s98, %s99
      %p108 = scmp.eq.s32.totalorder %s20, 0
      %p109 = por %p107, %p108
      %p110 = scmp.ne.s32.totalorder %s98, %s99
      %p111 = scmp.eq.s32.totalorder %s21, 3
      %p112 = por %p110, %p111
      %p114 = scmp.ne.s32.totalorder %s99, %s113
      %p115 = scmp.eq.s32.totalorder %s21, 0
      %p116 = por %p114, %p115
      %s118 = sadd.s32 %s117, 1
      %p121 = scmp.eq.s32.totalorder %s15, 3
      %p122 = scmp.ne.s32.totalorder %s117, %s119
      %p123 = scmp.eq.s32.totalorder %s15, 0
      %p124 = por %p122, %p123
      %p125 = scmp.ne.s32.totalorder %s117, %s119
      %p126 = scmp.eq.s32.totalorder %s20, 3
      %p127 = por %p125, %p126
      %p128 = scmp.ne.s32.totalorder %s119, %s120
      %p129 = scmp.eq.s32.totalorder %s20, 0
      %p130 = por %p128, %p129
      %p131 = scmp.ne.s32.totalorder %s119, %s120
      %p132 = scmp.eq.s32.totalorder %s21, 3
      %p133 = por %p131, %p132
      %p135 = scmp.ne.s32.totalorder %s120, %s134
      %p136 = scmp.eq.s32.totalorder %s21, 0
      %p137 = por %p135, %p136
      %s139 = sadd.s32 %s138, 1
      %p142 = scmp.eq.s32.totalorder %s15, 3
      %p143 = scmp.ne.s32.totalorder %s138, %s140
      %p144 = scmp.eq.s32.totalorder %s15, 0
      %p145 = por %p143, %p144
      %p146 = scmp.ne.s32.totalorder %s138, %s140
      %p147 = scmp.eq.s32.totalorder %s20, 3
      %p148 = por %p146, %p147
      %p149 = scmp.ne.s32.totalorder %s140, %s141
      %p150 = scmp.eq.s32.totalorder %s20, 0
      %p151 = por %p149, %p150
      %p152 = scmp.ne.s32.totalorder %s140, %s141
      %p153 = scmp.eq.s32.totalorder %s21, 3
      %p154 = por %p152, %p153
      %p156 = scmp.ne.s32.totalorder %s141, %s155
      %p157 = scmp.eq.s32.totalorder %s21, 0
      %p158 = por %p156, %p157
      %s160 = sadd.s32 %s159, 1
      %p163 = scmp.eq.s32.totalorder %s15, 3
      %p164 = scmp.ne.s32.totalorder %s159, %s161
      %p165 = scmp.eq.s32.totalorder %s15, 0
      %p166 = por %p164, %p165
      %p167 = scmp.ne.s32.totalorder %s159, %s161
      %p168 = scmp.eq.s32.totalorder %s20, 3
      %p169 = por %p167, %p168
      %p170 = scmp.ne.s32.totalorder %s161, %s162
      %p171 = scmp.eq.s32.totalorder %s20, 0
      %p172 = por %p170, %p171
      %p173 = scmp.ne.s32.totalorder %s161, %s162
      %p174 = scmp.eq.s32.totalorder %s21, 3
      %p175 = por %p173, %p174
      %p177 = scmp.ne.s32.totalorder %s162, %s176
      %p178 = scmp.eq.s32.totalorder %s21, 0
      %p179 = por %p177, %p178
      %p180 = scmp.le.s32.totalorder 1, %s15
      %p181 = scmp.lt.s32.totalorder %s15, 5
      %p182 = pnand %p180, %p181
      %p183 = pneg %p182
      // Predicated region
      $region9: #{clip_video_spec_forward.1} parent=5 // pred_check
        _
      $region10: #{clip_video_spec_forward.1} parent=5 // pred_check_branch
        %185 = sbr.rel (%p182) target = $region12
      $region11: #{clip_video_spec_forward.1} parent=5 // pred_region
        %s186 = ssub.s32 %s15, 1
        // Predicated region
        $region13: #{clip_video_spec_forward.1} parent=11 // pred_check
          %p187 = pneg %p36
        $region14: #{clip_video_spec_forward.1} parent=11 // pred_check_branch
          %189 = sbr.rel (%p187) target = $region16
        $region15: #{clip_video_spec_forward.1} parent=11 // pred_region
          _
        $region16: #{clip_video_spec_forward.1} parent=11 // pred_fallthru
          _
        // Predicated region
        $region17: #{clip_video_spec_forward.1} parent=11 // pred_check
          %p190 = pneg %p109
        $region18: #{clip_video_spec_forward.1} parent=11 // pred_check_branch
          %192 = sbr.rel (%p190) target = $region20
        $region19: #{clip_video_spec_forward.1} parent=11 // pred_region
          _
        $region20: #{clip_video_spec_forward.1} parent=11 // pred_fallthru
          _
        // Predicated region
        $region21: #{clip_video_spec_forward.1} parent=11 // pred_check
          %p193 = pneg %p130
        $region22: #{clip_video_spec_forward.1} parent=11 // pred_check_branch
          %195 = sbr.rel (%p193) target = $region24
        $region23: #{clip_video_spec_forward.1} parent=11 // pred_region
          _
        $region24: #{clip_video_spec_forward.1} parent=11 // pred_fallthru
          _
      $region12: #{clip_video_spec_forward.1} parent=5 // pred_fallthru
        _
      %p196 = scmp.lt.s32.totalorder %s15, 4
      // Predicated region
      $region25: #{clip_video_spec_forward.1} parent=5 // pred_check
        %p197 = pneg %p196
      $region26: #{clip_video_spec_forward.1} parent=5 // pred_check_branch
        %199 = sbr.rel (%p197) target = $region28
      $region27: #{clip_video_spec_forward.1} parent=5 // pred_region
        // Predicated region
        $region29: #{clip_video_spec_forward.1} parent=27 // pred_check
          %p200 = pneg %p56
        $region30: #{clip_video_spec_forward.1} parent=27 // pred_check_branch
          %202 = sbr.rel (%p200) target = $region32
        $region31: #{clip_video_spec_forward.1} parent=27 // pred_region
          %s203 = smul.u32 4, %s15
          %p204 = scmp.lt.s32.totalorder %s203, 15
          %s205 = scalar_select %p204, %s203, 15
          %s206 = smul.addr %s205, 4
          %s207 = scalar_lea.vmem %s1, %s206
          %s208 = smul.u32 4, %s15
        $region32: #{clip_video_spec_forward.1} parent=27 // pred_fallthru
          _
        // Predicated region
        $region33: #{clip_video_spec_forward.1} parent=27 // pred_check
          %p209 = pneg %p82
        $region34: #{clip_video_spec_forward.1} parent=27 // pred_check_branch
          %211 = sbr.rel (%p209) target = $region36
        $region35: #{clip_video_spec_forward.1} parent=27 // pred_region
          %s212 = smul.u32 64, %s15
          %p213 = scmp.lt.s32.totalorder %s212, 255
          %s214 = scalar_select %p213, %s212, 255
          %s215 = smul.addr %s214, 4
          %s216 = smul.addr %s215, 4
          %s217 = scalar_lea.vmem %s2, %s216
          %s218 = smul.u32 64, %s15
        $region36: #{clip_video_spec_forward.1} parent=27 // pred_fallthru
          _
      $region28: #{clip_video_spec_forward.1} parent=5 // pred_fallthru
        _
      %p219 = scmp.le.s32.totalorder 1, %s15
      %p220 = scmp.lt.s32.totalorder %s15, 5
      %p221 = pnand %p219, %p220
      %p222 = pneg %p221
      // Predicated region
      $region37: #{clip_video_spec_forward.1} parent=5 // pred_check
        _
      $region38: #{clip_video_spec_forward.1} parent=5 // pred_check_branch
        %224 = sbr.rel (%p221) target = $region40
      $region39: #{clip_video_spec_forward.1} parent=5 // pred_region
        %s225 = ssub.s32 %s15, 1
        %p226 = pneg %p36
        %p227 = pneg %p33
        %s228 = smul.u32 4, %s20
        %p229 = scmp.lt.s32.totalorder %s228, 15
        %s230 = scalar_select %p229, %s228, 15
        %s231 = smul.addr %s230, 4
        %s232 = scalar_lea.vmem %s1, %s231
        %p233 = pneg %p62
        %p234 = pneg %p59
        %s235 = smul.u32 64, %s20
        %p236 = scmp.lt.s32.totalorder %s235, 255
        %s237 = scalar_select %p236, %s235, 255
        %s238 = smul.addr %s237, 4
        %s239 = smul.addr %s238, 4
        %s240 = scalar_lea.vmem %s2, %s239
        %p241 = pneg %p88
        %p242 = pneg %p85
        %p243 = pneg %p109
        %p244 = pneg %p106
        %p245 = pneg %p130
        %p246 = pneg %p127
        %p247 = pneg %p151
        %p248 = pneg %p148
        %p249 = pneg %p172
        %p250 = pneg %p169
        %s251 = smul.u32 4, %s20
        %p252 = scmp.lt.s32.totalorder %s251, 15
        %s253 = scalar_select %p252, %s251, 15
        %s254 = smul.addr %s253, 4
        %s255 = scalar_lea.vmem %s1, %s254
        %s256 = smul.u32 4, %s20
        %s257 = smul.u32 64, %s20
        %p258 = scmp.lt.s32.totalorder %s257, 255
        %s259 = scalar_select %p258, %s257, 255
        %s260 = smul.addr %s259, 4
        %s261 = smul.addr %s260, 4
        %s262 = scalar_lea.vmem %s2, %s261
        %s263 = smul.u32 64, %s20
        %p264 = scmp.eq.s32.totalorder %s20, 0
        // Predicated region
        $region41: #{clip_video_spec_forward.1} parent=39 // pred_check
          %p265 = pneg %p264
        $region42: #{clip_video_spec_forward.1} parent=39 // pred_check_branch
          %267 = sbr.rel (%p265) target = $region44
        $region43: #{clip_video_spec_forward.1} parent=39 // pred_region
          %268 = vst [vmem:[#allocation2] sm:$0xff] 0.0
          %269 = vst [vmem:[#allocation2 + $0x8] sm:$0xff] 0.0
          %270 = vst [vmem:[#allocation2 + $0x10] sm:$0xff] 0.0
          %271 = vst [vmem:[#allocation2 + $0x18] sm:$0xff] 0.0
          %272 = vst [vmem:[#allocation2 + $0x20] sm:$0xff] 0.0
          %273 = vst [vmem:[#allocation2 + $0x28] sm:$0xff] 0.0
          %274 = vst [vmem:[#allocation2 + $0x30] sm:$0xff] 0.0
          %275 = vst [vmem:[#allocation2 + $0x38] sm:$0xff] 0.0
          %276 = vst [vmem:[#allocation2 + $0x40] sm:$0xff] 0.0
          %277 = vst [vmem:[#allocation2 + $0x48] sm:$0xff] 0.0
          %278 = vst [vmem:[#allocation2 + $0x50] sm:$0xff] 0.0
          %279 = vst [vmem:[#allocation2 + $0x58] sm:$0xff] 0.0
          %280 = vst [vmem:[#allocation2 + $0x60] sm:$0xff] 0.0
          %281 = vst [vmem:[#allocation2 + $0x68] sm:$0xff] 0.0
          %282 = vst [vmem:[#allocation2 + $0x70] sm:$0xff] 0.0
          %283 = vst [vmem:[#allocation2 + $0x78] sm:$0xff] 0.0
        $region44: #{clip_video_spec_forward.1} parent=39 // pred_fallthru
          _
        %v284 = vld [vmem:[%s0] sm:$0xff]
        %v285 = vld [vmem:[%s0 + $0x8] sm:$0xff]
        %v286 = vld [vmem:[%s0 + $0x10] sm:$0xff]
        %v287 = vld [vmem:[%s0 + $0x18] sm:$0xff]
        %v288 = vld [vmem:[%s255] sm:$0x77]
        %v289 = vld [vmem:[%s255 + $0x8] sm:$0x77]
        %291 = vset.pattern.permute.xlu0 0
        %292 = vperm.xlu0 %291, %v284
        %v293 = vpop.permute.xlu0 %292
        %296 = vset.pattern.permute.xlu0 0
        %297 = vperm.xlu0 %296, %v285
        %v298 = vpop.permute.xlu0 %297
        %301 = vset.pattern.permute.xlu0 0
        %302 = vperm.xlu0 %301, %v286
        %v303 = vpop.permute.xlu0 %302
        %306 = vset.pattern.permute.xlu0 0
        %307 = vperm.xlu0 %306, %v287
        %v308 = vpop.permute.xlu0 %307
        %v312 = vlaneseq
        %v313 = vshrl.u32 %v312, 7
        %v314 = vsub.s32 0, %v313
        %v315 = vrot.slane %v288, %v314
        %v316 = vlaneseq
        %v317 = vshrl.u32 %v316, 7
        %v318 = vsub.s32 4, %v317
        %v319 = vrot.slane %v288, %v318
        %v320 = vlaneseq
        %v321 = vshrl.u32 %v320, 7
        %v322 = vsub.s32 0, %v321
        %v323 = vrot.slane %v289, %v322
        %v324 = vlaneseq
        %v325 = vshrl.u32 %v324, 7
        %v326 = vsub.s32 4, %v325
        %v327 = vrot.slane %v289, %v326
        %v332 = vlaneseq
        %v333 = vshrl.u32 %v332, 7
        %v334 = vsub.s32 0, %v333
        %v335 = vrot.slane %v315, %v334
        %v336 = vlaneseq
        %v337 = vshrl.u32 %v336, 7
        %v338 = vsub.s32 0, %v337
        %v339 = vrot.slane %v319, %v338
        %v340 = vlaneseq
        %v341 = vshrl.u32 %v340, 7
        %v342 = vsub.s32 0, %v341
        %v343 = vrot.slane %v323, %v342
        %v344 = vlaneseq
        %v345 = vshrl.u32 %v344, 7
        %v346 = vsub.s32 0, %v345
        %v347 = vrot.slane %v327, %v346
        %v348 = vmul.f32 %v293, %v335
        %v349 = vmul.f32 %v293, %v339
        %v350 = vmul.f32 %v293, %v343
        %v351 = vmul.f32 %v293, %v347
        %v352 = vmul.f32 %v298, %v335
        %v353 = vmul.f32 %v298, %v339
        %v354 = vmul.f32 %v298, %v343
        %v355 = vmul.f32 %v298, %v347
        %v356 = vmul.f32 %v303, %v335
        %v357 = vmul.f32 %v303, %v339
        %v358 = vmul.f32 %v303, %v343
        %v359 = vmul.f32 %v303, %v347
        %v360 = vmul.f32 %v308, %v335
        %v361 = vmul.f32 %v308, %v339
        %v362 = vmul.f32 %v308, %v343
        %v363 = vmul.f32 %v308, %v347
        %364 = vset.pattern.permute.xlu0 1
        %365 = vperm.xlu0 %364, %v284
        %v366 = vpop.permute.xlu0 %365
        %368 = vset.pattern.permute.xlu0 1
        %369 = vperm.xlu0 %368, %v285
        %v370 = vpop.permute.xlu0 %369
        %372 = vset.pattern.permute.xlu0 1
        %373 = vperm.xlu0 %372, %v286
        %v374 = vpop.permute.xlu0 %373
        %376 = vset.pattern.permute.xlu0 1
        %377 = vperm.xlu0 %376, %v287
        %v378 = vpop.permute.xlu0 %377
        %v380 = vlaneseq
        %v381 = vshrl.u32 %v380, 7
        %v382 = vsub.s32 1, %v381
        %v383 = vrot.slane %v288, %v382
        %v384 = vlaneseq
        %v385 = vshrl.u32 %v384, 7
        %v386 = vsub.s32 5, %v385
        %v387 = vrot.slane %v288, %v386
        %v388 = vlaneseq
        %v389 = vshrl.u32 %v388, 7
        %v390 = vsub.s32 1, %v389
        %v391 = vrot.slane %v289, %v390
        %v392 = vlaneseq
        %v393 = vshrl.u32 %v392, 7
        %v394 = vsub.s32 5, %v393
        %v395 = vrot.slane %v289, %v394
        %v400 = vlaneseq
        %v401 = vshrl.u32 %v400, 7
        %v402 = vsub.s32 1, %v401
        %v403 = vrot.slane %v383, %v402
        %v404 = vlaneseq
        %v405 = vshrl.u32 %v404, 7
        %v406 = vsub.s32 1, %v405
        %v407 = vrot.slane %v387, %v406
        %v408 = vlaneseq
        %v409 = vshrl.u32 %v408, 7
        %v410 = vsub.s32 1, %v409
        %v411 = vrot.slane %v391, %v410
        %v412 = vlaneseq
        %v413 = vshrl.u32 %v412, 7
        %v414 = vsub.s32 1, %v413
        %v415 = vrot.slane %v395, %v414
        %v416 = vmul.f32 %v366, %v403
        %v417 = vmul.f32 %v366, %v407
        %v418 = vmul.f32 %v366, %v411
        %v419 = vmul.f32 %v366, %v415
        %v420 = vmul.f32 %v370, %v403
        %v421 = vmul.f32 %v370, %v407
        %v422 = vmul.f32 %v370, %v411
        %v423 = vmul.f32 %v370, %v415
        %v424 = vmul.f32 %v374, %v403
        %v425 = vmul.f32 %v374, %v407
        %v426 = vmul.f32 %v374, %v411
        %v427 = vmul.f32 %v374, %v415
        %v428 = vmul.f32 %v378, %v403
        %v429 = vmul.f32 %v378, %v407
        %v430 = vmul.f32 %v378, %v411
        %v431 = vmul.f32 %v378, %v415
        %v432 = vadd.f32 %v348, %v416
        %v433 = vadd.f32 %v349, %v417
        %v434 = vadd.f32 %v350, %v418
        %v435 = vadd.f32 %v351, %v419
        %v436 = vadd.f32 %v352, %v420
        %v437 = vadd.f32 %v353, %v421
        %v438 = vadd.f32 %v354, %v422
        %v439 = vadd.f32 %v355, %v423
        %v440 = vadd.f32 %v356, %v424
        %v441 = vadd.f32 %v357, %v425
        %v442 = vadd.f32 %v358, %v426
        %v443 = vadd.f32 %v359, %v427
        %v444 = vadd.f32 %v360, %v428
        %v445 = vadd.f32 %v361, %v429
        %v446 = vadd.f32 %v362, %v430
        %v447 = vadd.f32 %v363, %v431
        %448 = vset.pattern.permute.xlu0 2
        %449 = vperm.xlu0 %448, %v284
        %v450 = vpop.permute.xlu0 %449
        %452 = vset.pattern.permute.xlu0 2
        %453 = vperm.xlu0 %452, %v285
        %v454 = vpop.permute.xlu0 %453
        %456 = vset.pattern.permute.xlu0 2
        %457 = vperm.xlu0 %456, %v286
        %v458 = vpop.permute.xlu0 %457
        %460 = vset.pattern.permute.xlu0 2
        %461 = vperm.xlu0 %460, %v287
        %v462 = vpop.permute.xlu0 %461
        %v464 = vlaneseq
        %v465 = vshrl.u32 %v464, 7
        %v466 = vsub.s32 2, %v465
        %v467 = vrot.slane %v288, %v466
        %v468 = vlaneseq
        %v469 = vshrl.u32 %v468, 7
        %v470 = vsub.s32 6, %v469
        %v471 = vrot.slane %v288, %v470
        %v472 = vlaneseq
        %v473 = vshrl.u32 %v472, 7
        %v474 = vsub.s32 2, %v473
        %v475 = vrot.slane %v289, %v474
        %v476 = vlaneseq
        %v477 = vshrl.u32 %v476, 7
        %v478 = vsub.s32 6, %v477
        %v479 = vrot.slane %v289, %v478
        %v484 = vlaneseq
        %v485 = vshrl.u32 %v484, 7
        %v486 = vsub.s32 2, %v485
        %v487 = vrot.slane %v467, %v486
        %v488 = vlaneseq
        %v489 = vshrl.u32 %v488, 7
        %v490 = vsub.s32 2, %v489
        %v491 = vrot.slane %v471, %v490
        %v492 = vlaneseq
        %v493 = vshrl.u32 %v492, 7
        %v494 = vsub.s32 2, %v493
        %v495 = vrot.slane %v475, %v494
        %v496 = vlaneseq
        %v497 = vshrl.u32 %v496, 7
        %v498 = vsub.s32 2, %v497
        %v499 = vrot.slane %v479, %v498
        %v500 = vmul.f32 %v450, %v487
        %v501 = vmul.f32 %v450, %v491
        %v502 = vmul.f32 %v450, %v495
        %v503 = vmul.f32 %v450, %v499
        %v504 = vmul.f32 %v454, %v487
        %v505 = vmul.f32 %v454, %v491
        %v506 = vmul.f32 %v454, %v495
        %v507 = vmul.f32 %v454, %v499
        %v508 = vmul.f32 %v458, %v487
        %v509 = vmul.f32 %v458, %v491
        %v510 = vmul.f32 %v458, %v495
        %v511 = vmul.f32 %v458, %v499
        %v512 = vmul.f32 %v462, %v487
        %v513 = vmul.f32 %v462, %v491
        %v514 = vmul.f32 %v462, %v495
        %v515 = vmul.f32 %v462, %v499
        %v516 = vadd.f32 %v432, %v500
        %v517 = vadd.f32 %v433, %v501
        %v518 = vadd.f32 %v434, %v502
        %v519 = vadd.f32 %v435, %v503
        %v520 = vadd.f32 %v436, %v504
        %v521 = vadd.f32 %v437, %v505
        %v522 = vadd.f32 %v438, %v506
        %v523 = vadd.f32 %v439, %v507
        %v524 = vadd.f32 %v440, %v508
        %v525 = vadd.f32 %v441, %v509
        %v526 = vadd.f32 %v442, %v510
        %v527 = vadd.f32 %v443, %v511
        %v528 = vadd.f32 %v444, %v512
        %v529 = vadd.f32 %v445, %v513
        %v530 = vadd.f32 %v446, %v514
        %v531 = vadd.f32 %v447, %v515
        %v532 = vld [vmem:[#allocation2] sm:$0xff]
        %v533 = vld [vmem:[#allocation2 + $0x8] sm:$0xff]
        %v534 = vld [vmem:[#allocation2 + $0x10] sm:$0xff]
        %v535 = vld [vmem:[#allocation2 + $0x18] sm:$0xff]
        %v536 = vld [vmem:[#allocation2 + $0x20] sm:$0xff]
        %v537 = vld [vmem:[#allocation2 + $0x28] sm:$0xff]
        %v538 = vld [vmem:[#allocation2 + $0x30] sm:$0xff]
        %v539 = vld [vmem:[#allocation2 + $0x38] sm:$0xff]
        %v540 = vld [vmem:[#allocation2 + $0x40] sm:$0xff]
        %v541 = vld [vmem:[#allocation2 + $0x48] sm:$0xff]
        %v542 = vld [vmem:[#allocation2 + $0x50] sm:$0xff]
        %v543 = vld [vmem:[#allocation2 + $0x58] sm:$0xff]
        %v544 = vld [vmem:[#allocation2 + $0x60] sm:$0xff]
        %v545 = vld [vmem:[#allocation2 + $0x68] sm:$0xff]
        %v546 = vld [vmem:[#allocation2 + $0x70] sm:$0xff]
        %v547 = vld [vmem:[#allocation2 + $0x78] sm:$0xff]
        %v548 = vpack.c.bf16 %v520, %v516
        %v549 = vpack.c.bf16 %v521, %v517
        %v550 = vpack.c.bf16 %v522, %v518
        %v551 = vpack.c.bf16 %v523, %v519
        %v552 = vpack.c.bf16 %v528, %v524
        %v553 = vpack.c.bf16 %v529, %v525
        %v554 = vpack.c.bf16 %v530, %v526
        %v555 = vpack.c.bf16 %v531, %v527
        %v556 = vld [vmem:[%s262] sm:$0xff]
        %v557 = vld [vmem:[%s262 + $0x8] sm:$0xff]
        %v558 = vld [vmem:[%s262 + $0x10] sm:$0xff]
        %v559 = vld [vmem:[%s262 + $0x18] sm:$0xff]
        %v560 = vld [vmem:[%s262 + $0x20] sm:$0xff]
        %v561 = vld [vmem:[%s262 + $0x28] sm:$0xff]
        %v562 = vld [vmem:[%s262 + $0x30] sm:$0xff]
        %v563 = vld [vmem:[%s262 + $0x38] sm:$0xff]
        %v564 = vld [vmem:[%s262 + $0x40] sm:$0xff]
        %v565 = vld [vmem:[%s262 + $0x48] sm:$0xff]
        %v566 = vld [vmem:[%s262 + $0x50] sm:$0xff]
        %v567 = vld [vmem:[%s262 + $0x58] sm:$0xff]
        %v568 = vld [vmem:[%s262 + $0x60] sm:$0xff]
        %v569 = vld [vmem:[%s262 + $0x68] sm:$0xff]
        %v570 = vld [vmem:[%s262 + $0x70] sm:$0xff]
        %v571 = vld [vmem:[%s262 + $0x78] sm:$0xff]
        %v572 = vld [vmem:[%s262 + $0x80] sm:$0xff]
        %v573 = vld [vmem:[%s262 + $0x88] sm:$0xff]
        %v574 = vld [vmem:[%s262 + $0x90] sm:$0xff]
        %v575 = vld [vmem:[%s262 + $0x98] sm:$0xff]
        %v576 = vld [vmem:[%s262 + $0xa0] sm:$0xff]
        %v577 = vld [vmem:[%s262 + $0xa8] sm:$0xff]
        %v578 = vld [vmem:[%s262 + $0xb0] sm:$0xff]
        %v579 = vld [vmem:[%s262 + $0xb8] sm:$0xff]
        %v580 = vld [vmem:[%s262 + $0xc0] sm:$0xff]
        %v581 = vld [vmem:[%s262 + $0xc8] sm:$0xff]
        %v582 = vld [vmem:[%s262 + $0xd0] sm:$0xff]
        %v583 = vld [vmem:[%s262 + $0xd8] sm:$0xff]
        %v584 = vld [vmem:[%s262 + $0xe0] sm:$0xff]
        %v585 = vld [vmem:[%s262 + $0xe8] sm:$0xff]
        %v586 = vld [vmem:[%s262 + $0xf0] sm:$0xff]
        %v587 = vld [vmem:[%s262 + $0xf8] sm:$0xff]
        %v588 = vld [vmem:[%s262 + $0x100] sm:$0xff]
        %v589 = vld [vmem:[%s262 + $0x108] sm:$0xff]
        %v590 = vld [vmem:[%s262 + $0x110] sm:$0xff]
        %v591 = vld [vmem:[%s262 + $0x118] sm:$0xff]
        %v592 = vld [vmem:[%s262 + $0x120] sm:$0xff]
        %v593 = vld [vmem:[%s262 + $0x128] sm:$0xff]
        %v594 = vld [vmem:[%s262 + $0x130] sm:$0xff]
        %v595 = vld [vmem:[%s262 + $0x138] sm:$0xff]
        %v596 = vld [vmem:[%s262 + $0x140] sm:$0xff]
        %v597 = vld [vmem:[%s262 + $0x148] sm:$0xff]
        %v598 = vld [vmem:[%s262 + $0x150] sm:$0xff]
        %v599 = vld [vmem:[%s262 + $0x158] sm:$0xff]
        %v600 = vld [vmem:[%s262 + $0x160] sm:$0xff]
        %v601 = vld [vmem:[%s262 + $0x168] sm:$0xff]
        %v602 = vld [vmem:[%s262 + $0x170] sm:$0xff]
        %v603 = vld [vmem:[%s262 + $0x178] sm:$0xff]
        %v604 = vld [vmem:[%s262 + $0x180] sm:$0xff]
        %v605 = vld [vmem:[%s262 + $0x188] sm:$0xff]
        %v606 = vld [vmem:[%s262 + $0x190] sm:$0xff]
        %v607 = vld [vmem:[%s262 + $0x198] sm:$0xff]
        %v608 = vld [vmem:[%s262 + $0x1a0] sm:$0xff]
        %v609 = vld [vmem:[%s262 + $0x1a8] sm:$0xff]
        %v610 = vld [vmem:[%s262 + $0x1b0] sm:$0xff]
        %v611 = vld [vmem:[%s262 + $0x1b8] sm:$0xff]
        %v612 = vld [vmem:[%s262 + $0x1c0] sm:$0xff]
        %v613 = vld [vmem:[%s262 + $0x1c8] sm:$0xff]
        %v614 = vld [vmem:[%s262 + $0x1d0] sm:$0xff]
        %v615 = vld [vmem:[%s262 + $0x1d8] sm:$0xff]
        %v616 = vld [vmem:[%s262 + $0x1e0] sm:$0xff]
        %v617 = vld [vmem:[%s262 + $0x1e8] sm:$0xff]
        %v618 = vld [vmem:[%s262 + $0x1f0] sm:$0xff]
        %v619 = vld [vmem:[%s262 + $0x1f8] sm:$0xff]
        %v620 = vld [vmem:[%s262 + $0x200] sm:$0xff]
        %v621 = vld [vmem:[%s262 + $0x208] sm:$0xff]
        %v622 = vld [vmem:[%s262 + $0x210] sm:$0xff]
        %v623 = vld [vmem:[%s262 + $0x218] sm:$0xff]
        %v624 = vld [vmem:[%s262 + $0x220] sm:$0xff]
        %v625 = vld [vmem:[%s262 + $0x228] sm:$0xff]
        %v626 = vld [vmem:[%s262 + $0x230] sm:$0xff]
        %v627 = vld [vmem:[%s262 + $0x238] sm:$0xff]
        %v628 = vld [vmem:[%s262 + $0x240] sm:$0xff]
        %v629 = vld [vmem:[%s262 + $0x248] sm:$0xff]
        %v630 = vld [vmem:[%s262 + $0x250] sm:$0xff]
        %v631 = vld [vmem:[%s262 + $0x258] sm:$0xff]
        %v632 = vld [vmem:[%s262 + $0x260] sm:$0xff]
        %v633 = vld [vmem:[%s262 + $0x268] sm:$0xff]
        %v634 = vld [vmem:[%s262 + $0x270] sm:$0xff]
        %v635 = vld [vmem:[%s262 + $0x278] sm:$0xff]
        %v636 = vld [vmem:[%s262 + $0x280] sm:$0xff]
        %v637 = vld [vmem:[%s262 + $0x288] sm:$0xff]
        %v638 = vld [vmem:[%s262 + $0x290] sm:$0xff]
        %v639 = vld [vmem:[%s262 + $0x298] sm:$0xff]
        %v640 = vld [vmem:[%s262 + $0x2a0] sm:$0xff]
        %v641 = vld [vmem:[%s262 + $0x2a8] sm:$0xff]
        %v642 = vld [vmem:[%s262 + $0x2b0] sm:$0xff]
        %v643 = vld [vmem:[%s262 + $0x2b8] sm:$0xff]
        %v644 = vld [vmem:[%s262 + $0x2c0] sm:$0xff]
        %v645 = vld [vmem:[%s262 + $0x2c8] sm:$0xff]
        %v646 = vld [vmem:[%s262 + $0x2d0] sm:$0xff]
        %v647 = vld [vmem:[%s262 + $0x2d8] sm:$0xff]
        %v648 = vld [vmem:[%s262 + $0x2e0] sm:$0xff]
        %v649 = vld [vmem:[%s262 + $0x2e8] sm:$0xff]
        %v650 = vld [vmem:[%s262 + $0x2f0] sm:$0xff]
        %v651 = vld [vmem:[%s262 + $0x2f8] sm:$0xff]
        %v652 = vld [vmem:[%s262 + $0x300] sm:$0xff]
        %v653 = vld [vmem:[%s262 + $0x308] sm:$0xff]
        %v654 = vld [vmem:[%s262 + $0x310] sm:$0xff]
        %v655 = vld [vmem:[%s262 + $0x318] sm:$0xff]
        %v656 = vld [vmem:[%s262 + $0x320] sm:$0xff]
        %v657 = vld [vmem:[%s262 + $0x328] sm:$0xff]
        %v658 = vld [vmem:[%s262 + $0x330] sm:$0xff]
        %v659 = vld [vmem:[%s262 + $0x338] sm:$0xff]
        %v660 = vld [vmem:[%s262 + $0x340] sm:$0xff]
        %v661 = vld [vmem:[%s262 + $0x348] sm:$0xff]
        %v662 = vld [vmem:[%s262 + $0x350] sm:$0xff]
        %v663 = vld [vmem:[%s262 + $0x358] sm:$0xff]
        %v664 = vld [vmem:[%s262 + $0x360] sm:$0xff]
        %v665 = vld [vmem:[%s262 + $0x368] sm:$0xff]
        %v666 = vld [vmem:[%s262 + $0x370] sm:$0xff]
        %v667 = vld [vmem:[%s262 + $0x378] sm:$0xff]
        %v668 = vld [vmem:[%s262 + $0x380] sm:$0xff]
        %v669 = vld [vmem:[%s262 + $0x388] sm:$0xff]
        %v670 = vld [vmem:[%s262 + $0x390] sm:$0xff]
        %v671 = vld [vmem:[%s262 + $0x398] sm:$0xff]
        %v672 = vld [vmem:[%s262 + $0x3a0] sm:$0xff]
        %v673 = vld [vmem:[%s262 + $0x3a8] sm:$0xff]
        %v674 = vld [vmem:[%s262 + $0x3b0] sm:$0xff]
        %v675 = vld [vmem:[%s262 + $0x3b8] sm:$0xff]
        %v676 = vld [vmem:[%s262 + $0x3c0] sm:$0xff]
        %v677 = vld [vmem:[%s262 + $0x3c8] sm:$0xff]
        %v678 = vld [vmem:[%s262 + $0x3d0] sm:$0xff]
        %v679 = vld [vmem:[%s262 + $0x3d8] sm:$0xff]
        %v680 = vld [vmem:[%s262 + $0x3e0] sm:$0xff]
        %v681 = vld [vmem:[%s262 + $0x3e8] sm:$0xff]
        %v682 = vld [vmem:[%s262 + $0x3f0] sm:$0xff]
        %v683 = vld [vmem:[%s262 + $0x3f8] sm:$0xff]
        %v812 = vunpack.c.l.b16 %v556
        %v813 = vunpack.c.h.b16 %v556
        %v814 = vunpack.c.l.b16 %v557
        %v815 = vunpack.c.h.b16 %v557
        %v816 = vunpack.c.l.b16 %v558
        %v817 = vunpack.c.h.b16 %v558
        %v818 = vunpack.c.l.b16 %v559
        %v819 = vunpack.c.h.b16 %v559
        %v820 = vunpack.c.l.b16 %v560
        %v821 = vunpack.c.h.b16 %v560
        %v822 = vunpack.c.l.b16 %v561
        %v823 = vunpack.c.h.b16 %v561
        %v824 = vunpack.c.l.b16 %v562
        %v825 = vunpack.c.h.b16 %v562
        %v826 = vunpack.c.l.b16 %v563
        %v827 = vunpack.c.h.b16 %v563
        %v828 = vunpack.c.l.b16 %v564
        %v829 = vunpack.c.h.b16 %v564
        %v830 = vunpack.c.l.b16 %v565
        %v831 = vunpack.c.h.b16 %v565
        %v832 = vunpack.c.l.b16 %v566
        %v833 = vunpack.c.h.b16 %v566
        %v834 = vunpack.c.l.b16 %v567
        %v835 = vunpack.c.h.b16 %v567
        %v836 = vunpack.c.l.b16 %v568
        %v837 = vunpack.c.h.b16 %v568
        %v838 = vunpack.c.l.b16 %v569
        %v839 = vunpack.c.h.b16 %v569
        %v840 = vunpack.c.l.b16 %v570
        %v841 = vunpack.c.h.b16 %v570
        %v842 = vunpack.c.l.b16 %v571
        %v843 = vunpack.c.h.b16 %v571
        %v844 = vunpack.c.l.b16 %v572
        %v845 = vunpack.c.h.b16 %v572
        %v846 = vunpack.c.l.b16 %v573
        %v847 = vunpack.c.h.b16 %v573
        %v848 = vunpack.c.l.b16 %v574
        %v849 = vunpack.c.h.b16 %v574
        %v850 = vunpack.c.l.b16 %v575
        %v851 = vunpack.c.h.b16 %v575
        %v852 = vunpack.c.l.b16 %v576
        %v853 = vunpack.c.h.b16 %v576
        %v854 = vunpack.c.l.b16 %v577
        %v855 = vunpack.c.h.b16 %v577
        %v856 = vunpack.c.l.b16 %v578
        %v857 = vunpack.c.h.b16 %v578
        %v858 = vunpack.c.l.b16 %v579
        %v859 = vunpack.c.h.b16 %v579
        %v860 = vunpack.c.l.b16 %v580
        %v861 = vunpack.c.h.b16 %v580
        %v862 = vunpack.c.l.b16 %v581
        %v863 = vunpack.c.h.b16 %v581
        %v864 = vunpack.c.l.b16 %v582
        %v865 = vunpack.c.h.b16 %v582
        %v866 = vunpack.c.l.b16 %v583
        %v867 = vunpack.c.h.b16 %v583
        %v868 = vunpack.c.l.b16 %v584
        %v869 = vunpack.c.h.b16 %v584
        %v870 = vunpack.c.l.b16 %v585
        %v871 = vunpack.c.h.b16 %v585
        %v872 = vunpack.c.l.b16 %v586
        %v873 = vunpack.c.h.b16 %v586
        %v874 = vunpack.c.l.b16 %v587
        %v875 = vunpack.c.h.b16 %v587
        %v876 = vunpack.c.l.b16 %v588
        %v877 = vunpack.c.h.b16 %v588
        %v878 = vunpack.c.l.b16 %v589
        %v879 = vunpack.c.h.b16 %v589
        %v880 = vunpack.c.l.b16 %v590
        %v881 = vunpack.c.h.b16 %v590
        %v882 = vunpack.c.l.b16 %v591
        %v883 = vunpack.c.h.b16 %v591
        %v884 = vunpack.c.l.b16 %v592
        %v885 = vunpack.c.h.b16 %v592
        %v886 = vunpack.c.l.b16 %v593
        %v887 = vunpack.c.h.b16 %v593
        %v888 = vunpack.c.l.b16 %v594
        %v889 = vunpack.c.h.b16 %v594
        %v890 = vunpack.c.l.b16 %v595
        %v891 = vunpack.c.h.b16 %v595
        %v892 = vunpack.c.l.b16 %v596
        %v893 = vunpack.c.h.b16 %v596
        %v894 = vunpack.c.l.b16 %v597
        %v895 = vunpack.c.h.b16 %v597
        %v896 = vunpack.c.l.b16 %v598
        %v897 = vunpack.c.h.b16 %v598
        %v898 = vunpack.c.l.b16 %v599
        %v899 = vunpack.c.h.b16 %v599
        %v900 = vunpack.c.l.b16 %v600
        %v901 = vunpack.c.h.b16 %v600
        %v902 = vunpack.c.l.b16 %v601
        %v903 = vunpack.c.h.b16 %v601
        %v904 = vunpack.c.l.b16 %v602
        %v905 = vunpack.c.h.b16 %v602
        %v906 = vunpack.c.l.b16 %v603
        %v907 = vunpack.c.h.b16 %v603
        %v908 = vunpack.c.l.b16 %v604
        %v909 = vunpack.c.h.b16 %v604
        %v910 = vunpack.c.l.b16 %v605
        %v911 = vunpack.c.h.b16 %v605
        %v912 = vunpack.c.l.b16 %v606
        %v913 = vunpack.c.h.b16 %v606
        %v914 = vunpack.c.l.b16 %v607
        %v915 = vunpack.c.h.b16 %v607
        %v916 = vunpack.c.l.b16 %v608
        %v917 = vunpack.c.h.b16 %v608
        %v918 = vunpack.c.l.b16 %v609
        %v919 = vunpack.c.h.b16 %v609
        %v920 = vunpack.c.l.b16 %v610
        %v921 = vunpack.c.h.b16 %v610
        %v922 = vunpack.c.l.b16 %v611
        %v923 = vunpack.c.h.b16 %v611
        %v924 = vunpack.c.l.b16 %v612
        %v925 = vunpack.c.h.b16 %v612
        %v926 = vunpack.c.l.b16 %v613
        %v927 = vunpack.c.h.b16 %v613
        %v928 = vunpack.c.l.b16 %v614
        %v929 = vunpack.c.h.b16 %v614
        %v930 = vunpack.c.l.b16 %v615
        %v931 = vunpack.c.h.b16 %v615
        %v932 = vunpack.c.l.b16 %v616
        %v933 = vunpack.c.h.b16 %v616
        %v934 = vunpack.c.l.b16 %v617
        %v935 = vunpack.c.h.b16 %v617
        %v936 = vunpack.c.l.b16 %v618
        %v937 = vunpack.c.h.b16 %v618
        %v938 = vunpack.c.l.b16 %v619
        %v939 = vunpack.c.h.b16 %v619
        %v940 = vunpack.c.l.b16 %v620
        %v941 = vunpack.c.h.b16 %v620
        %v942 = vunpack.c.l.b16 %v621
        %v943 = vunpack.c.h.b16 %v621
        %v944 = vunpack.c.l.b16 %v622
        %v945 = vunpack.c.h.b16 %v622
        %v946 = vunpack.c.l.b16 %v623
        %v947 = vunpack.c.h.b16 %v623
        %v948 = vunpack.c.l.b16 %v624
        %v949 = vunpack.c.h.b16 %v624
        %v950 = vunpack.c.l.b16 %v625
        %v951 = vunpack.c.h.b16 %v625
        %v952 = vunpack.c.l.b16 %v626
        %v953 = vunpack.c.h.b16 %v626
        %v954 = vunpack.c.l.b16 %v627
        %v955 = vunpack.c.h.b16 %v627
        %v956 = vunpack.c.l.b16 %v628
        %v957 = vunpack.c.h.b16 %v628
        %v958 = vunpack.c.l.b16 %v629
        %v959 = vunpack.c.h.b16 %v629
        %v960 = vunpack.c.l.b16 %v630
        %v961 = vunpack.c.h.b16 %v630
        %v962 = vunpack.c.l.b16 %v631
        %v963 = vunpack.c.h.b16 %v631
        %v964 = vunpack.c.l.b16 %v632
        %v965 = vunpack.c.h.b16 %v632
        %v966 = vunpack.c.l.b16 %v633
        %v967 = vunpack.c.h.b16 %v633
        %v968 = vunpack.c.l.b16 %v634
        %v969 = vunpack.c.h.b16 %v634
        %v970 = vunpack.c.l.b16 %v635
        %v971 = vunpack.c.h.b16 %v635
        %v972 = vunpack.c.l.b16 %v636
        %v973 = vunpack.c.h.b16 %v636
        %v974 = vunpack.c.l.b16 %v637
        %v975 = vunpack.c.h.b16 %v637
        %v976 = vunpack.c.l.b16 %v638
        %v977 = vunpack.c.h.b16 %v638
        %v978 = vunpack.c.l.b16 %v639
        %v979 = vunpack.c.h.b16 %v639
        %v980 = vunpack.c.l.b16 %v640
        %v981 = vunpack.c.h.b16 %v640
        %v982 = vunpack.c.l.b16 %v641
        %v983 = vunpack.c.h.b16 %v641
        %v984 = vunpack.c.l.b16 %v642
        %v985 = vunpack.c.h.b16 %v642
        %v986 = vunpack.c.l.b16 %v643
        %v987 = vunpack.c.h.b16 %v643
        %v988 = vunpack.c.l.b16 %v644
        %v989 = vunpack.c.h.b16 %v644
        %v990 = vunpack.c.l.b16 %v645
        %v991 = vunpack.c.h.b16 %v645
        %v992 = vunpack.c.l.b16 %v646
        %v993 = vunpack.c.h.b16 %v646
        %v994 = vunpack.c.l.b16 %v647
        %v995 = vunpack.c.h.b16 %v647
        %v996 = vunpack.c.l.b16 %v648
        %v997 = vunpack.c.h.b16 %v648
        %v998 = vunpack.c.l.b16 %v649
        %v999 = vunpack.c.h.b16 %v649
        %v1000 = vunpack.c.l.b16 %v650
        %v1001 = vunpack.c.h.b16 %v650
        %v1002 = vunpack.c.l.b16 %v651
        %v1003 = vunpack.c.h.b16 %v651
        %v1004 = vunpack.c.l.b16 %v652
        %v1005 = vunpack.c.h.b16 %v652
        %v1006 = vunpack.c.l.b16 %v653
        %v1007 = vunpack.c.h.b16 %v653
        %v1008 = vunpack.c.l.b16 %v654
        %v1009 = vunpack.c.h.b16 %v654
        %v1010 = vunpack.c.l.b16 %v655
        %v1011 = vunpack.c.h.b16 %v655
        %v1012 = vunpack.c.l.b16 %v656
        %v1013 = vunpack.c.h.b16 %v656
        %v1014 = vunpack.c.l.b16 %v657
        %v1015 = vunpack.c.h.b16 %v657
        %v1016 = vunpack.c.l.b16 %v658
        %v1017 = vunpack.c.h.b16 %v658
        %v1018 = vunpack.c.l.b16 %v659
        %v1019 = vunpack.c.h.b16 %v659
        %v1020 = vunpack.c.l.b16 %v660
        %v1021 = vunpack.c.h.b16 %v660
        %v1022 = vunpack.c.l.b16 %v661
        %v1023 = vunpack.c.h.b16 %v661
        %v1024 = vunpack.c.l.b16 %v662
        %v1025 = vunpack.c.h.b16 %v662
        %v1026 = vunpack.c.l.b16 %v663
        %v1027 = vunpack.c.h.b16 %v663
        %v1028 = vunpack.c.l.b16 %v664
        %v1029 = vunpack.c.h.b16 %v664
        %v1030 = vunpack.c.l.b16 %v665
        %v1031 = vunpack.c.h.b16 %v665
        %v1032 = vunpack.c.l.b16 %v666
        %v1033 = vunpack.c.h.b16 %v666
        %v1034 = vunpack.c.l.b16 %v667
        %v1035 = vunpack.c.h.b16 %v667
        %v1036 = vunpack.c.l.b16 %v668
        %v1037 = vunpack.c.h.b16 %v668
        %v1038 = vunpack.c.l.b16 %v669
        %v1039 = vunpack.c.h.b16 %v669
        %v1040 = vunpack.c.l.b16 %v670
        %v1041 = vunpack.c.h.b16 %v670
        %v1042 = vunpack.c.l.b16 %v671
        %v1043 = vunpack.c.h.b16 %v671
        %v1044 = vunpack.c.l.b16 %v672
        %v1045 = vunpack.c.h.b16 %v672
        %v1046 = vunpack.c.l.b16 %v673
        %v1047 = vunpack.c.h.b16 %v673
        %v1048 = vunpack.c.l.b16 %v674
        %v1049 = vunpack.c.h.b16 %v674
        %v1050 = vunpack.c.l.b16 %v675
        %v1051 = vunpack.c.h.b16 %v675
        %v1052 = vunpack.c.l.b16 %v676
        %v1053 = vunpack.c.h.b16 %v676
        %v1054 = vunpack.c.l.b16 %v677
        %v1055 = vunpack.c.h.b16 %v677
        %v1056 = vunpack.c.l.b16 %v678
        %v1057 = vunpack.c.h.b16 %v678
        %v1058 = vunpack.c.l.b16 %v679
        %v1059 = vunpack.c.h.b16 %v679
        %v1060 = vunpack.c.l.b16 %v680
        %v1061 = vunpack.c.h.b16 %v680
        %v1062 = vunpack.c.l.b16 %v681
        %v1063 = vunpack.c.h.b16 %v681
        %v1064 = vunpack.c.l.b16 %v682
        %v1065 = vunpack.c.h.b16 %v682
        %v1066 = vunpack.c.l.b16 %v683
        %v1067 = vunpack.c.h.b16 %v683
        %v1068 = vpack.c.b16 %v816, %v812
        %v1069 = vpack.c.b16 %v817, %v813
        %v1070 = vpack.c.b16 %v818, %v814
        %v1071 = vpack.c.b16 %v819, %v815
        %v1072 = vpack.c.b16 %v824, %v820
        %v1073 = vpack.c.b16 %v825, %v821
        %v1074 = vpack.c.b16 %v826, %v822
        %v1075 = vpack.c.b16 %v827, %v823
        %v1076 = vpack.c.b16 %v832, %v828
        %v1077 = vpack.c.b16 %v833, %v829
        %v1078 = vpack.c.b16 %v834, %v830
        %v1079 = vpack.c.b16 %v835, %v831
        %v1080 = vpack.c.b16 %v840, %v836
        %v1081 = vpack.c.b16 %v841, %v837
        %v1082 = vpack.c.b16 %v842, %v838
        %v1083 = vpack.c.b16 %v843, %v839
        %v1084 = vpack.c.b16 %v848, %v844
        %v1085 = vpack.c.b16 %v849, %v845
        %v1086 = vpack.c.b16 %v850, %v846
        %v1087 = vpack.c.b16 %v851, %v847
        %v1088 = vpack.c.b16 %v856, %v852
        %v1089 = vpack.c.b16 %v857, %v853
        %v1090 = vpack.c.b16 %v858, %v854
        %v1091 = vpack.c.b16 %v859, %v855
        %v1092 = vpack.c.b16 %v864, %v860
        %v1093 = vpack.c.b16 %v865, %v861
        %v1094 = vpack.c.b16 %v866, %v862
        %v1095 = vpack.c.b16 %v867, %v863
        %v1096 = vpack.c.b16 %v872, %v868
        %v1097 = vpack.c.b16 %v873, %v869
        %v1098 = vpack.c.b16 %v874, %v870
        %v1099 = vpack.c.b16 %v875, %v871
        %v1100 = vpack.c.b16 %v880, %v876
        %v1101 = vpack.c.b16 %v881, %v877
        %v1102 = vpack.c.b16 %v882, %v878
        %v1103 = vpack.c.b16 %v883, %v879
        %v1104 = vpack.c.b16 %v888, %v884
        %v1105 = vpack.c.b16 %v889, %v885
        %v1106 = vpack.c.b16 %v890, %v886
        %v1107 = vpack.c.b16 %v891, %v887
        %v1108 = vpack.c.b16 %v896, %v892
        %v1109 = vpack.c.b16 %v897, %v893
        %v1110 = vpack.c.b16 %v898, %v894
        %v1111 = vpack.c.b16 %v899, %v895
        %v1112 = vpack.c.b16 %v904, %v900
        %v1113 = vpack.c.b16 %v905, %v901
        %v1114 = vpack.c.b16 %v906, %v902
        %v1115 = vpack.c.b16 %v907, %v903
        %v1116 = vpack.c.b16 %v912, %v908
        %v1117 = vpack.c.b16 %v913, %v909
        %v1118 = vpack.c.b16 %v914, %v910
        %v1119 = vpack.c.b16 %v915, %v911
        %v1120 = vpack.c.b16 %v920, %v916
        %v1121 = vpack.c.b16 %v921, %v917
        %v1122 = vpack.c.b16 %v922, %v918
        %v1123 = vpack.c.b16 %v923, %v919
        %v1124 = vpack.c.b16 %v928, %v924
        %v1125 = vpack.c.b16 %v929, %v925
        %v1126 = vpack.c.b16 %v930, %v926
        %v1127 = vpack.c.b16 %v931, %v927
        %v1128 = vpack.c.b16 %v936, %v932
        %v1129 = vpack.c.b16 %v937, %v933
        %v1130 = vpack.c.b16 %v938, %v934
        %v1131 = vpack.c.b16 %v939, %v935
        %v1132 = vpack.c.b16 %v944, %v940
        %v1133 = vpack.c.b16 %v945, %v941
        %v1134 = vpack.c.b16 %v946, %v942
        %v1135 = vpack.c.b16 %v947, %v943
        %v1136 = vpack.c.b16 %v952, %v948
        %v1137 = vpack.c.b16 %v953, %v949
        %v1138 = vpack.c.b16 %v954, %v950
        %v1139 = vpack.c.b16 %v955, %v951
        %v1140 = vpack.c.b16 %v960, %v956
        %v1141 = vpack.c.b16 %v961, %v957
        %v1142 = vpack.c.b16 %v962, %v958
        %v1143 = vpack.c.b16 %v963, %v959
        %v1144 = vpack.c.b16 %v968, %v964
        %v1145 = vpack.c.b16 %v969, %v965
        %v1146 = vpack.c.b16 %v970, %v966
        %v1147 = vpack.c.b16 %v971, %v967
        %v1148 = vpack.c.b16 %v976, %v972
        %v1149 = vpack.c.b16 %v977, %v973
        %v1150 = vpack.c.b16 %v978, %v974
        %v1151 = vpack.c.b16 %v979, %v975
        %v1152 = vpack.c.b16 %v984, %v980
        %v1153 = vpack.c.b16 %v985, %v981
        %v1154 = vpack.c.b16 %v986, %v982
        %v1155 = vpack.c.b16 %v987, %v983
        %v1156 = vpack.c.b16 %v992, %v988
        %v1157 = vpack.c.b16 %v993, %v989
        %v1158 = vpack.c.b16 %v994, %v990
        %v1159 = vpack.c.b16 %v995, %v991
        %v1160 = vpack.c.b16 %v1000, %v996
        %v1161 = vpack.c.b16 %v1001, %v997
        %v1162 = vpack.c.b16 %v1002, %v998
        %v1163 = vpack.c.b16 %v1003, %v999
        %v1164 = vpack.c.b16 %v1008, %v1004
        %v1165 = vpack.c.b16 %v1009, %v1005
        %v1166 = vpack.c.b16 %v1010, %v1006
        %v1167 = vpack.c.b16 %v1011, %v1007
        %v1168 = vpack.c.b16 %v1016, %v1012
        %v1169 = vpack.c.b16 %v1017, %v1013
        %v1170 = vpack.c.b16 %v1018, %v1014
        %v1171 = vpack.c.b16 %v1019, %v1015
        %v1172 = vpack.c.b16 %v1024, %v1020
        %v1173 = vpack.c.b16 %v1025, %v1021
        %v1174 = vpack.c.b16 %v1026, %v1022
        %v1175 = vpack.c.b16 %v1027, %v1023
        %v1176 = vpack.c.b16 %v1032, %v1028
        %v1177 = vpack.c.b16 %v1033, %v1029
        %v1178 = vpack.c.b16 %v1034, %v1030
        %v1179 = vpack.c.b16 %v1035, %v1031
        %v1180 = vpack.c.b16 %v1040, %v1036
        %v1181 = vpack.c.b16 %v1041, %v1037
        %v1182 = vpack.c.b16 %v1042, %v1038
        %v1183 = vpack.c.b16 %v1043, %v1039
        %v1184 = vpack.c.b16 %v1048, %v1044
        %v1185 = vpack.c.b16 %v1049, %v1045
        %v1186 = vpack.c.b16 %v1050, %v1046
        %v1187 = vpack.c.b16 %v1051, %v1047
        %v1188 = vpack.c.b16 %v1056, %v1052
        %v1189 = vpack.c.b16 %v1057, %v1053
        %v1190 = vpack.c.b16 %v1058, %v1054
        %v1191 = vpack.c.b16 %v1059, %v1055
        %v1192 = vpack.c.b16 %v1064, %v1060
        %v1193 = vpack.c.b16 %v1065, %v1061
        %v1194 = vpack.c.b16 %v1066, %v1062
        %v1195 = vpack.c.b16 %v1067, %v1063
        %1324 = vmatprep.subr.bf16.mxu0 %v1069
        %1325 = vmatpush1.bf16.msra.mxu0 %v1068
        %1326 = vmatprep.subr.bf16.mxu0 %v1073
        %1327 = vmatpush1.bf16.msra.mxu0 %v1072
        %1328 = vmatprep.subr.bf16.mxu0 %v1077
        %1329 = vmatpush1.bf16.msra.mxu0 %v1076
        %1330 = vmatprep.subr.bf16.mxu0 %v1081
        %1331 = vmatpush1.bf16.msra.mxu0 %v1080
        %1332 = vmatprep.subr.bf16.mxu0 %v1085
        %1333 = vmatpush1.bf16.msra.mxu0 %v1084
        %1334 = vmatprep.subr.bf16.mxu0 %v1089
        %1335 = vmatpush1.bf16.msra.mxu0 %v1088
        %1336 = vmatprep.subr.bf16.mxu0 %v1093
        %1337 = vmatpush1.bf16.msra.mxu0 %v1092
        %1338 = vmatprep.subr.bf16.mxu0 %v1097
        %1339 = vmatpush1.bf16.msra.mxu0 %v1096
        %1340 = vmatprep.subr.bf16.mxu0 %v1101
        %1341 = vmatpush1.bf16.msra.mxu0 %v1100
        %1342 = vmatprep.subr.bf16.mxu0 %v1105
        %1343 = vmatpush1.bf16.msra.mxu0 %v1104
        %1344 = vmatprep.subr.bf16.mxu0 %v1109
        %1345 = vmatpush1.bf16.msra.mxu0 %v1108
        %1346 = vmatprep.subr.bf16.mxu0 %v1113
        %1347 = vmatpush1.bf16.msra.mxu0 %v1112
        %1348 = vmatprep.subr.bf16.mxu0 %v1117
        %1349 = vmatpush1.bf16.msra.mxu0 %v1116
        %1350 = vmatprep.subr.bf16.mxu0 %v1121
        %1351 = vmatpush1.bf16.msra.mxu0 %v1120
        %1352 = vmatprep.subr.bf16.mxu0 %v1125
        %1353 = vmatpush1.bf16.msra.mxu0 %v1124
        %1354 = vmatprep.subr.bf16.mxu0 %v1129
        %1355 = vmatpush1.bf16.msra.mxu0 %v1128
        %1356 = vmatprep.mubr.bf16.mxu0 %v549
        %1357 = vmatmul.mubr.bf16.gmra.mrb[0].mxu0 %v548
        %v1358 = vpop.f32.mrb[0].mxu0
        %v1359 = vadd.f32 0.0, %v1358
        %v1360 = vpop.f32.mrb[0].mxu0
        %v1361 = vadd.f32 0.0, %v1360
        %v1362 = vpop.f32.mrb[0].mxu0
        %v1363 = vadd.f32 0.0, %v1362
        %v1364 = vpop.f32.mrb[0].mxu0
        %v1365 = vadd.f32 0.0, %v1364
        %1366 = vmatprep.mubr.bf16.mxu0 %v553
        %1367 = vmatmul.mubr.bf16.gmra.mrb[0].mxu0 %v552
        %v1368 = vpop.f32.mrb[0].mxu0
        %v1369 = vadd.f32 0.0, %v1368
        %v1370 = vpop.f32.mrb[0].mxu0
        %v1371 = vadd.f32 0.0, %v1370
        %v1372 = vpop.f32.mrb[0].mxu0
        %v1373 = vadd.f32 0.0, %v1372
        %v1374 = vpop.f32.mrb[0].mxu0
        %v1375 = vadd.f32 0.0, %v1374
        %1376 = vdwg.mxu0
        %1377 = vmatprep.subr.bf16.mxu0 %v1133
        %1378 = vmatpush1.bf16.msra.mxu0 %v1132
        %1379 = vmatprep.subr.bf16.mxu0 %v1137
        %1380 = vmatpush1.bf16.msra.mxu0 %v1136
        %1381 = vmatprep.subr.bf16.mxu0 %v1141
        %1382 = vmatpush1.bf16.msra.mxu0 %v1140
        %1383 = vmatprep.subr.bf16.mxu0 %v1145
        %1384 = vmatpush1.bf16.msra.mxu0 %v1144
        %1385 = vmatprep.subr.bf16.mxu0 %v1149
        %1386 = vmatpush1.bf16.msra.mxu0 %v1148
        %1387 = vmatprep.subr.bf16.mxu0 %v1153
        %1388 = vmatpush1.bf16.msra.mxu0 %v1152
        %1389 = vmatprep.subr.bf16.mxu0 %v1157
        %1390 = vmatpush1.bf16.msra.mxu0 %v1156
        %1391 = vmatprep.subr.bf16.mxu0 %v1161
        %1392 = vmatpush1.bf16.msra.mxu0 %v1160
        %1393 = vmatprep.subr.bf16.mxu0 %v1165
        %1394 = vmatpush1.bf16.msra.mxu0 %v1164
        %1395 = vmatprep.subr.bf16.mxu0 %v1169
        %1396 = vmatpush1.bf16.msra.mxu0 %v1168
        %1397 = vmatprep.subr.bf16.mxu0 %v1173
        %1398 = vmatpush1.bf16.msra.mxu0 %v1172
        %1399 = vmatprep.subr.bf16.mxu0 %v1177
        %1400 = vmatpush1.bf16.msra.mxu0 %v1176
        %1401 = vmatprep.subr.bf16.mxu0 %v1181
        %1402 = vmatpush1.bf16.msra.mxu0 %v1180
        %1403 = vmatprep.subr.bf16.mxu0 %v1185
        %1404 = vmatpush1.bf16.msra.mxu0 %v1184
        %1405 = vmatprep.subr.bf16.mxu0 %v1189
        %1406 = vmatpush1.bf16.msra.mxu0 %v1188
        %1407 = vmatprep.subr.bf16.mxu0 %v1193
        %1408 = vmatpush1.bf16.msra.mxu0 %v1192
        %1409 = vmatprep.mubr.bf16.mxu0 %v551
        %1410 = vmatmul.mubr.bf16.gmra.mrb[0].mxu0 %v550
        %v1411 = vpop.f32.mrb[0].mxu0
        %v1412 = vadd.f32 %v1359, %v1411
        %v1413 = vpop.f32.mrb[0].mxu0
        %v1414 = vadd.f32 %v1361, %v1413
        %v1415 = vpop.f32.mrb[0].mxu0
        %v1416 = vadd.f32 %v1363, %v1415
        %v1417 = vpop.f32.mrb[0].mxu0
        %v1418 = vadd.f32 %v1365, %v1417
        %1419 = vmatprep.mubr.bf16.mxu0 %v555
        %1420 = vmatmul.mubr.bf16.gmra.mrb[0].mxu0 %v554
        %v1421 = vpop.f32.mrb[0].mxu0
        %v1422 = vadd.f32 %v1369, %v1421
        %v1423 = vpop.f32.mrb[0].mxu0
        %v1424 = vadd.f32 %v1371, %v1423
        %v1425 = vpop.f32.mrb[0].mxu0
        %v1426 = vadd.f32 %v1373, %v1425
        %v1427 = vpop.f32.mrb[0].mxu0
        %v1428 = vadd.f32 %v1375, %v1427
        %1429 = vdwg.mxu0
        %1430 = vmatprep.subr.bf16.mxu0 %v1071
        %1431 = vmatpush1.bf16.msra.mxu0 %v1070
        %1432 = vmatprep.subr.bf16.mxu0 %v1075
        %1433 = vmatpush1.bf16.msra.mxu0 %v1074
        %1434 = vmatprep.subr.bf16.mxu0 %v1079
        %1435 = vmatpush1.bf16.msra.mxu0 %v1078
        %1436 = vmatprep.subr.bf16.mxu0 %v1083
        %1437 = vmatpush1.bf16.msra.mxu0 %v1082
        %1438 = vmatprep.subr.bf16.mxu0 %v1087
        %1439 = vmatpush1.bf16.msra.mxu0 %v1086
        %1440 = vmatprep.subr.bf16.mxu0 %v1091
        %1441 = vmatpush1.bf16.msra.mxu0 %v1090
        %1442 = vmatprep.subr.bf16.mxu0 %v1095
        %1443 = vmatpush1.bf16.msra.mxu0 %v1094
        %1444 = vmatprep.subr.bf16.mxu0 %v1099
        %1445 = vmatpush1.bf16.msra.mxu0 %v1098
        %1446 = vmatprep.subr.bf16.mxu0 %v1103
        %1447 = vmatpush1.bf16.msra.mxu0 %v1102
        %1448 = vmatprep.subr.bf16.mxu0 %v1107
        %1449 = vmatpush1.bf16.msra.mxu0 %v1106
        %1450 = vmatprep.subr.bf16.mxu0 %v1111
        %1451 = vmatpush1.bf16.msra.mxu0 %v1110
        %1452 = vmatprep.subr.bf16.mxu0 %v1115
        %1453 = vmatpush1.bf16.msra.mxu0 %v1114
        %1454 = vmatprep.subr.bf16.mxu0 %v1119
        %1455 = vmatpush1.bf16.msra.mxu0 %v1118
        %1456 = vmatprep.subr.bf16.mxu0 %v1123
        %1457 = vmatpush1.bf16.msra.mxu0 %v1122
        %1458 = vmatprep.subr.bf16.mxu0 %v1127
        %1459 = vmatpush1.bf16.msra.mxu0 %v1126
        %1460 = vmatprep.subr.bf16.mxu0 %v1131
        %1461 = vmatpush1.bf16.msra.mxu0 %v1130
        %1462 = vmatprep.mubr.bf16.mxu0 %v549
        %1463 = vmatmul.mubr.bf16.gmra.mrb[0].mxu0 %v548
        %v1464 = vpop.f32.mrb[0].mxu0
        %v1465 = vadd.f32 0.0, %v1464
        %v1466 = vpop.f32.mrb[0].mxu0
        %v1467 = vadd.f32 0.0, %v1466
        %v1468 = vpop.f32.mrb[0].mxu0
        %v1469 = vadd.f32 0.0, %v1468
        %v1470 = vpop.f32.mrb[0].mxu0
        %v1471 = vadd.f32 0.0, %v1470
        %1472 = vmatprep.mubr.bf16.mxu0 %v553
        %1473 = vmatmul.mubr.bf16.gmra.mrb[0].mxu0 %v552
        %v1474 = vpop.f32.mrb[0].mxu0
        %v1475 = vadd.f32 0.0, %v1474
        %v1476 = vpop.f32.mrb[0].mxu0
        %v1477 = vadd.f32 0.0, %v1476
        %v1478 = vpop.f32.mrb[0].mxu0
        %v1479 = vadd.f32 0.0, %v1478
        %v1480 = vpop.f32.mrb[0].mxu0
        %v1481 = vadd.f32 0.0, %v1480
        %1482 = vdwg.mxu0
        %1483 = vmatprep.subr.bf16.mxu0 %v1135
        %1484 = vmatpush1.bf16.msra.mxu0 %v1134
        %1485 = vmatprep.subr.bf16.mxu0 %v1139
        %1486 = vmatpush1.bf16.msra.mxu0 %v1138
        %1487 = vmatprep.subr.bf16.mxu0 %v1143
        %1488 = vmatpush1.bf16.msra.mxu0 %v1142
        %1489 = vmatprep.subr.bf16.mxu0 %v1147
        %1490 = vmatpush1.bf16.msra.mxu0 %v1146
        %1491 = vmatprep.subr.bf16.mxu0 %v1151
        %1492 = vmatpush1.bf16.msra.mxu0 %v1150
        %1493 = vmatprep.subr.bf16.mxu0 %v1155
        %1494 = vmatpush1.bf16.msra.mxu0 %v1154
        %1495 = vmatprep.subr.bf16.mxu0 %v1159
        %1496 = vmatpush1.bf16.msra.mxu0 %v1158
        %1497 = vmatprep.subr.bf16.mxu0 %v1163
        %1498 = vmatpush1.bf16.msra.mxu0 %v1162
        %1499 = vmatprep.subr.bf16.mxu0 %v1167
        %1500 = vmatpush1.bf16.msra.mxu0 %v1166
        %1501 = vmatprep.subr.bf16.mxu0 %v1171
        %1502 = vmatpush1.bf16.msra.mxu0 %v1170
        %1503 = vmatprep.subr.bf16.mxu0 %v1175
        %1504 = vmatpush1.bf16.msra.mxu0 %v1174
        %1505 = vmatprep.subr.bf16.mxu0 %v1179
        %1506 = vmatpush1.bf16.msra.mxu0 %v1178
        %1507 = vmatprep.subr.bf16.mxu0 %v1183
        %1508 = vmatpush1.bf16.msra.mxu0 %v1182
        %1509 = vmatprep.subr.bf16.mxu0 %v1187
        %1510 = vmatpush1.bf16.msra.mxu0 %v1186
        %1511 = vmatprep.subr.bf16.mxu0 %v1191
        %1512 = vmatpush1.bf16.msra.mxu0 %v1190
        %1513 = vmatprep.subr.bf16.mxu0 %v1195
        %1514 = vmatpush1.bf16.msra.mxu0 %v1194
        %1515 = vmatprep.mubr.bf16.mxu0 %v551
        %1516 = vmatmul.mubr.bf16.gmra.mrb[0].mxu0 %v550
        %v1517 = vpop.f32.mrb[0].mxu0
        %v1518 = vadd.f32 %v1465, %v1517
        %v1519 = vpop.f32.mrb[0].mxu0
        %v1520 = vadd.f32 %v1467, %v1519
        %v1521 = vpop.f32.mrb[0].mxu0
        %v1522 = vadd.f32 %v1469, %v1521
        %v1523 = vpop.f32.mrb[0].mxu0
        %v1524 = vadd.f32 %v1471, %v1523
        %1525 = vmatprep.mubr.bf16.mxu0 %v555
        %1526 = vmatmul.mubr.bf16.gmra.mrb[0].mxu0 %v554
        %v1527 = vpop.f32.mrb[0].mxu0
        %v1528 = vadd.f32 %v1475, %v1527
        %v1529 = vpop.f32.mrb[0].mxu0
        %v1530 = vadd.f32 %v1477, %v1529
        %v1531 = vpop.f32.mrb[0].mxu0
        %v1532 = vadd.f32 %v1479, %v1531
        %v1533 = vpop.f32.mrb[0].mxu0
        %v1534 = vadd.f32 %v1481, %v1533
        %1535 = vdwg.mxu0
        %v1536 = vadd.f32 %v532, %v1412
        %v1537 = vadd.f32 %v533, %v1414
        %v1538 = vadd.f32 %v534, %v1518
        %v1539 = vadd.f32 %v535, %v1520
        %v1540 = vadd.f32 %v536, %v1416
        %v1541 = vadd.f32 %v537, %v1418
        %v1542 = vadd.f32 %v538, %v1522
        %v1543 = vadd.f32 %v539, %v1524
        %v1544 = vadd.f32 %v540, %v1422
        %v1545 = vadd.f32 %v541, %v1424
        %v1546 = vadd.f32 %v542, %v1528
        %v1547 = vadd.f32 %v543, %v1530
        %v1548 = vadd.f32 %v544, %v1426
        %v1549 = vadd.f32 %v545, %v1428
        %v1550 = vadd.f32 %v546, %v1532
        %v1551 = vadd.f32 %v547, %v1534
        %1552 = vst [vmem:[#allocation2] sm:$0xff] %v1536
        %1553 = vst [vmem:[#allocation2 + $0x8] sm:$0xff] %v1537
        %1554 = vst [vmem:[#allocation2 + $0x10] sm:$0xff] %v1538
        %1555 = vst [vmem:[#allocation2 + $0x18] sm:$0xff] %v1539
        %1556 = vst [vmem:[#allocation2 + $0x20] sm:$0xff] %v1540
        %1557 = vst [vmem:[#allocation2 + $0x28] sm:$0xff] %v1541
        %1558 = vst [vmem:[#allocation2 + $0x30] sm:$0xff] %v1542
        %1559 = vst [vmem:[#allocation2 + $0x38] sm:$0xff] %v1543
        %1560 = vst [vmem:[#allocation2 + $0x40] sm:$0xff] %v1544
        %1561 = vst [vmem:[#allocation2 + $0x48] sm:$0xff] %v1545
        %1562 = vst [vmem:[#allocation2 + $0x50] sm:$0xff] %v1546
        %1563 = vst [vmem:[#allocation2 + $0x58] sm:$0xff] %v1547
        %1564 = vst [vmem:[#allocation2 + $0x60] sm:$0xff] %v1548
        %1565 = vst [vmem:[#allocation2 + $0x68] sm:$0xff] %v1549
        %1566 = vst [vmem:[#allocation2 + $0x70] sm:$0xff] %v1550
        %1567 = vst [vmem:[#allocation2 + $0x78] sm:$0xff] %v1551
        %p1568 = scmp.eq.s32.totalorder %s20, 3
        // Predicated region
        $region45: #{clip_video_spec_forward.1} parent=39 // pred_check
          %p1569 = pneg %p1568
        $region46: #{clip_video_spec_forward.1} parent=39 // pred_check_branch
          %1571 = sbr.rel (%p1569) target = $region48
        $region47: #{clip_video_spec_forward.1} parent=39 // pred_region
          %v1572 = vld [vmem:[#allocation2] sm:$0xff]
          %v1573 = vld [vmem:[#allocation2 + $0x8] sm:$0xff]
          %v1574 = vld [vmem:[#allocation2 + $0x10] sm:$0xff]
          %v1575 = vld [vmem:[#allocation2 + $0x18] sm:$0xff]
          %v1576 = vld [vmem:[#allocation2 + $0x20] sm:$0xff]
          %v1577 = vld [vmem:[#allocation2 + $0x28] sm:$0xff]
          %v1578 = vld [vmem:[#allocation2 + $0x30] sm:$0xff]
          %v1579 = vld [vmem:[#allocation2 + $0x38] sm:$0xff]
          %v1580 = vld [vmem:[#allocation2 + $0x40] sm:$0xff]
          %v1581 = vld [vmem:[#allocation2 + $0x48] sm:$0xff]
          %v1582 = vld [vmem:[#allocation2 + $0x50] sm:$0xff]
          %v1583 = vld [vmem:[#allocation2 + $0x58] sm:$0xff]
          %v1584 = vld [vmem:[#allocation2 + $0x60] sm:$0xff]
          %v1585 = vld [vmem:[#allocation2 + $0x68] sm:$0xff]
          %v1586 = vld [vmem:[#allocation2 + $0x70] sm:$0xff]
          %v1587 = vld [vmem:[#allocation2 + $0x78] sm:$0xff]
          %v1588 = vld [vmem:[%s3] sm:$0xf]
          %v1590 = vlaneseq
          %v1591 = vshrl.u32 %v1590, 7
          %v1592 = vsub.s32 0, %v1591
          %v1593 = vrot.slane %v1588, %v1592
          %v1594 = vlaneseq
          %v1595 = vshrl.u32 %v1594, 7
          %v1596 = vsub.s32 1, %v1595
          %v1597 = vrot.slane %v1588, %v1596
          %v1598 = vlaneseq
          %v1599 = vshrl.u32 %v1598, 7
          %v1600 = vsub.s32 2, %v1599
          %v1601 = vrot.slane %v1588, %v1600
          %v1602 = vlaneseq
          %v1603 = vshrl.u32 %v1602, 7
          %v1604 = vsub.s32 3, %v1603
          %v1605 = vrot.slane %v1588, %v1604
          %v1610 = vadd.f32 %v1572, %v1593
          %v1611 = vadd.f32 %v1573, %v1597
          %v1612 = vadd.f32 %v1574, %v1601
          %v1613 = vadd.f32 %v1575, %v1605
          %v1614 = vadd.f32 %v1576, %v1593
          %v1615 = vadd.f32 %v1577, %v1597
          %v1616 = vadd.f32 %v1578, %v1601
          %v1617 = vadd.f32 %v1579, %v1605
          %v1618 = vadd.f32 %v1580, %v1593
          %v1619 = vadd.f32 %v1581, %v1597
          %v1620 = vadd.f32 %v1582, %v1601
          %v1621 = vadd.f32 %v1583, %v1605
          %v1622 = vadd.f32 %v1584, %v1593
          %v1623 = vadd.f32 %v1585, %v1597
          %v1624 = vadd.f32 %v1586, %v1601
          %v1625 = vadd.f32 %v1587, %v1605
          %v1626 = vmax.f32 %v1610, %v1614
          %v1627 = vrot.slane %v1626, 4
          %v1628 = vmax.f32 %v1626, %v1627
          %v1629 = vrot.slane %v1628, 2
          %v1630 = vmax.f32 %v1628, %v1629
          %v1631 = vrot.slane %v1630, 1
          %v1632 = vmax.f32 %v1630, %v1631
          %v1633 = vmax.f32 %v1611, %v1615
          %v1634 = vrot.slane %v1633, 4
          %v1635 = vmax.f32 %v1633, %v1634
          %v1636 = vrot.slane %v1635, 2
          %v1637 = vmax.f32 %v1635, %v1636
          %v1638 = vrot.slane %v1637, 1
          %v1639 = vmax.f32 %v1637, %v1638
          %v1640 = vmax.f32 %v1612, %v1616
          %v1641 = vrot.slane %v1640, 4
          %v1642 = vmax.f32 %v1640, %v1641
          %v1643 = vrot.slane %v1642, 2
          %v1644 = vmax.f32 %v1642, %v1643
          %v1645 = vrot.slane %v1644, 1
          %v1646 = vmax.f32 %v1644, %v1645
          %v1647 = vmax.f32 %v1613, %v1617
          %v1648 = vrot.slane %v1647, 4
          %v1649 = vmax.f32 %v1647, %v1648
          %v1650 = vrot.slane %v1649, 2
          %v1651 = vmax.f32 %v1649, %v1650
          %v1652 = vrot.slane %v1651, 1
          %v1653 = vmax.f32 %v1651, %v1652
          %v1654 = vmax.f32 %v1618, %v1622
          %v1655 = vrot.slane %v1654, 4
          %v1656 = vmax.f32 %v1654, %v1655
          %v1657 = vrot.slane %v1656, 2
          %v1658 = vmax.f32 %v1656, %v1657
          %v1659 = vrot.slane %v1658, 1
          %v1660 = vmax.f32 %v1658, %v1659
          %v1661 = vmax.f32 %v1619, %v1623
          %v1662 = vrot.slane %v1661, 4
          %v1663 = vmax.f32 %v1661, %v1662
          %v1664 = vrot.slane %v1663, 2
          %v1665 = vmax.f32 %v1663, %v1664
          %v1666 = vrot.slane %v1665, 1
          %v1667 = vmax.f32 %v1665, %v1666
          %v1668 = vmax.f32 %v1620, %v1624
          %v1669 = vrot.slane %v1668, 4
          %v1670 = vmax.f32 %v1668, %v1669
          %v1671 = vrot.slane %v1670, 2
          %v1672 = vmax.f32 %v1670, %v1671
          %v1673 = vrot.slane %v1672, 1
          %v1674 = vmax.f32 %v1672, %v1673
          %v1675 = vmax.f32 %v1621, %v1625
          %v1676 = vrot.slane %v1675, 4
          %v1677 = vmax.f32 %v1675, %v1676
          %v1678 = vrot.slane %v1677, 2
          %v1679 = vmax.f32 %v1677, %v1678
          %v1680 = vrot.slane %v1679, 1
          %v1681 = vmax.f32 %v1679, %v1680
          %v1682 = vmul.f32 %v1632, %v1632
          %v1683 = vmul.f32 %v1639, %v1639
          %v1684 = vmul.f32 %v1646, %v1646
          %v1685 = vmul.f32 %v1653, %v1653
          %v1686 = vmul.f32 %v1660, %v1660
          %v1687 = vmul.f32 %v1667, %v1667
          %v1688 = vmul.f32 %v1674, %v1674
          %v1689 = vmul.f32 %v1681, %v1681
          %vm1698 = vcmask 1041409
          %v1699 = vsel %vm1698, %v1686, %v1682
          %v1700 = vsel %vm1698, %v1687, %v1683
          %v1701 = vsel %vm1698, %v1688, %v1684
          %v1702 = vsel %vm1698, %v1689, %v1685
          %vm1707 = vcmask 1041408
          %v1708 = vsel %vm1707, %v1699, 0.0
          %v1709 = vsel %vm1707, %v1700, 0.0
          %v1710 = vadd.f32 %v1708, %v1709
          %v1711 = vsel %vm1707, %v1701, 0.0
          %v1712 = vadd.f32 %v1710, %v1711
          %v1713 = vsel %vm1707, %v1702, 0.0
          %v1714 = vadd.f32 %v1712, %v1713
          %1715 = vadd.xlane.f32.xlu0 %v1714
          %v1716 = vpop.xlane.xlu0 %1715
          %v1717 = vmax.f32 %v1716, 1e-24
          %v1718 = vrsqrt.pop %v1717
          %v1720 = vrot.slane %v1718, 1
          %v1723 = vmul.f32 %v1632, %v1718
          %v1724 = vmul.f32 %v1639, %v1718
          %v1725 = vmul.f32 %v1646, %v1718
          %v1726 = vmul.f32 %v1653, %v1718
          %v1727 = vmul.f32 %v1660, %v1720
          %v1728 = vmul.f32 %v1667, %v1720
          %v1729 = vmul.f32 %v1674, %v1720
          %v1730 = vmul.f32 %v1681, %v1720
          %v1739 = vcombine.low %v1723, %v1724
          %v1740 = vcombine.low %v1725, %v1726
          %v1742 = vunpack.c.l.s4 1983009808
          %v1743 = vunpack.c.0.s8 %v1742
          %v1744 = vlaneseq
          %v1745 = vshrl.u32 %v1744, 7
          %v1746 = vsub.s32 %v1743, %v1745
          %v1747 = vrot.slane %v1739, %v1746
          %v1749 = vunpack.c.l.s4 1983009808
          %v1750 = vunpack.c.0.s8 %v1749
          %v1751 = vlaneseq
          %v1752 = vshrl.u32 %v1751, 7
          %v1753 = vsub.s32 %v1750, %v1752
          %v1754 = vrot.slane %v1740, %v1753
          %v1755 = vcombine.low %v1747, %v1754
          %v1756 = vcombine.low %v1727, %v1728
          %v1757 = vcombine.low %v1729, %v1730
          %v1759 = vunpack.c.l.s4 1983009808
          %v1760 = vunpack.c.0.s8 %v1759
          %v1761 = vlaneseq
          %v1762 = vshrl.u32 %v1761, 7
          %v1763 = vsub.s32 %v1760, %v1762
          %v1764 = vrot.slane %v1756, %v1763
          %v1766 = vunpack.c.l.s4 1983009808
          %v1767 = vunpack.c.0.s8 %v1766
          %v1768 = vlaneseq
          %v1769 = vshrl.u32 %v1768, 7
          %v1770 = vsub.s32 %v1767, %v1769
          %v1771 = vrot.slane %v1757, %v1770
          %v1772 = vcombine.low %v1764, %v1771
          %vm1773 = vcmask 1044484
          %v1774 = vsel %vm1773, %v1755, %v1755
          %vm1775 = vcmask 1046534
          %v1776 = vsel %vm1775, %v1755, %v1774
          %v1777 = vrot.slane %v1772, 7
          %v1778 = vsel %vm1698, %v1777, %v1776
          %vm1779 = vcmask 1043459
          %v1780 = vsel %vm1779, %v1777, %v1778
          %vm1781 = vcmask 1045509
          %v1782 = vsel %vm1781, %v1777, %v1780
          %vm1783 = vcmask 1047559
          %v1784 = vsel %vm1783, %v1777, %v1782
          %1786 = vst [vmem:[#allocation3] sm:$0xff] %v1784
          %v1787 = vld [vmem:[%s4] sm:$0xff]
          %v1788 = vld [vmem:[%s4 + $0x8] sm:$0xff]
          %v1789 = vld [vmem:[%s4 + $0x10] sm:$0xff]
          %v1790 = vld [vmem:[%s4 + $0x18] sm:$0xff]
          %v1791 = vld [vmem:[%s4 + $0x20] sm:$0xff]
          %v1792 = vld [vmem:[%s4 + $0x28] sm:$0xff]
          %v1793 = vld [vmem:[%s4 + $0x30] sm:$0xff]
          %v1794 = vld [vmem:[%s4 + $0x38] sm:$0xff]
          %v1795 = vld [vmem:[%s4 + $0x40] sm:$0xff]
          %v1796 = vld [vmem:[%s4 + $0x48] sm:$0xff]
          %v1797 = vld [vmem:[%s4 + $0x50] sm:$0xff]
          %v1798 = vld [vmem:[%s4 + $0x58] sm:$0xff]
          %v1799 = vld [vmem:[%s4 + $0x60] sm:$0xff]
          %v1800 = vld [vmem:[%s4 + $0x68] sm:$0xff]
          %v1801 = vld [vmem:[%s4 + $0x70] sm:$0xff]
          %v1802 = vld [vmem:[%s4 + $0x78] sm:$0xff]
          %v1803 = vmax.f32 %v1787, %v1791
          %v1804 = vrot.slane %v1803, 4
          %v1805 = vmax.f32 %v1803, %v1804
          %v1806 = vrot.slane %v1805, 2
          %v1807 = vmax.f32 %v1805, %v1806
          %v1808 = vrot.slane %v1807, 1
          %v1809 = vmax.f32 %v1807, %v1808
          %v1810 = vmax.f32 %v1788, %v1792
          %v1811 = vrot.slane %v1810, 4
          %v1812 = vmax.f32 %v1810, %v1811
          %v1813 = vrot.slane %v1812, 2
          %v1814 = vmax.f32 %v1812, %v1813
          %v1815 = vrot.slane %v1814, 1
          %v1816 = vmax.f32 %v1814, %v1815
          %v1817 = vmax.f32 %v1789, %v1793
          %v1818 = vrot.slane %v1817, 4
          %v1819 = vmax.f32 %v1817, %v1818
          %v1820 = vrot.slane %v1819, 2
          %v1821 = vmax.f32 %v1819, %v1820
          %v1822 = vrot.slane %v1821, 1
          %v1823 = vmax.f32 %v1821, %v1822
          %v1824 = vmax.f32 %v1790, %v1794
          %v1825 = vrot.slane %v1824, 4
          %v1826 = vmax.f32 %v1824, %v1825
          %v1827 = vrot.slane %v1826, 2
          %v1828 = vmax.f32 %v1826, %v1827
          %v1829 = vrot.slane %v1828, 1
          %v1830 = vmax.f32 %v1828, %v1829
          %v1831 = vmax.f32 %v1795, %v1799
          %v1832 = vrot.slane %v1831, 4
          %v1833 = vmax.f32 %v1831, %v1832
          %v1834 = vrot.slane %v1833, 2
          %v1835 = vmax.f32 %v1833, %v1834
          %v1836 = vrot.slane %v1835, 1
          %v1837 = vmax.f32 %v1835, %v1836
          %v1838 = vmax.f32 %v1796, %v1800
          %v1839 = vrot.slane %v1838, 4
          %v1840 = vmax.f32 %v1838, %v1839
          %v1841 = vrot.slane %v1840, 2
          %v1842 = vmax.f32 %v1840, %v1841
          %v1843 = vrot.slane %v1842, 1
          %v1844 = vmax.f32 %v1842, %v1843
          %v1845 = vmax.f32 %v1797, %v1801
          %v1846 = vrot.slane %v1845, 4
          %v1847 = vmax.f32 %v1845, %v1846
          %v1848 = vrot.slane %v1847, 2
          %v1849 = vmax.f32 %v1847, %v1848
          %v1850 = vrot.slane %v1849, 1
          %v1851 = vmax.f32 %v1849, %v1850
          %v1852 = vmax.f32 %v1798, %v1802
          %v1853 = vrot.slane %v1852, 4
          %v1854 = vmax.f32 %v1852, %v1853
          %v1855 = vrot.slane %v1854, 2
          %v1856 = vmax.f32 %v1854, %v1855
          %v1857 = vrot.slane %v1856, 1
          %v1858 = vmax.f32 %v1856, %v1857
          %v1859 = vmul.f32 %v1809, %v1809
          %v1860 = vmul.f32 %v1816, %v1816
          %v1861 = vmul.f32 %v1823, %v1823
          %v1862 = vmul.f32 %v1830, %v1830
          %v1863 = vmul.f32 %v1837, %v1837
          %v1864 = vmul.f32 %v1844, %v1844
          %v1865 = vmul.f32 %v1851, %v1851
          %v1866 = vmul.f32 %v1858, %v1858
          %v1875 = vsel %vm1698, %v1863, %v1859
          %v1876 = vsel %vm1698, %v1864, %v1860
          %v1877 = vsel %vm1698, %v1865, %v1861
          %v1878 = vsel %vm1698, %v1866, %v1862
          %v1883 = vsel %vm1707, %v1875, 0.0
          %v1884 = vsel %vm1707, %v1876, 0.0
          %v1885 = vadd.f32 %v1883, %v1884
          %v1886 = vsel %vm1707, %v1877, 0.0
          %v1887 = vadd.f32 %v1885, %v1886
          %v1888 = vsel %vm1707, %v1878, 0.0
          %v1889 = vadd.f32 %v1887, %v1888
          %1890 = vadd.xlane.f32.xlu0 %v1889
          %v1891 = vpop.xlane.xlu0 %1890
          %v1892 = vmax.f32 %v1891, 1e-24
          %v1893 = vrsqrt.pop %v1892
          %v1895 = vrot.slane %v1893, 1
          %v1898 = vmul.f32 %v1809, %v1893
          %v1899 = vmul.f32 %v1816, %v1893
          %v1900 = vmul.f32 %v1823, %v1893
          %v1901 = vmul.f32 %v1830, %v1893
          %v1902 = vmul.f32 %v1837, %v1895
          %v1903 = vmul.f32 %v1844, %v1895
          %v1904 = vmul.f32 %v1851, %v1895
          %v1905 = vmul.f32 %v1858, %v1895
          %v1914 = vcombine.low %v1898, %v1899
          %v1915 = vcombine.low %v1900, %v1901
          %v1917 = vunpack.c.l.s4 1983009808
          %v1918 = vunpack.c.0.s8 %v1917
          %v1919 = vlaneseq
          %v1920 = vshrl.u32 %v1919, 7
          %v1921 = vsub.s32 %v1918, %v1920
          %v1922 = vrot.slane %v1914, %v1921
          %v1924 = vunpack.c.l.s4 1983009808
          %v1925 = vunpack.c.0.s8 %v1924
          %v1926 = vlaneseq
          %v1927 = vshrl.u32 %v1926, 7
          %v1928 = vsub.s32 %v1925, %v1927
          %v1929 = vrot.slane %v1915, %v1928
          %v1930 = vcombine.low %v1922, %v1929
          %v1931 = vcombine.low %v1902, %v1903
          %v1932 = vcombine.low %v1904, %v1905
          %v1934 = vunpack.c.l.s4 1983009808
          %v1935 = vunpack.c.0.s8 %v1934
          %v1936 = vlaneseq
          %v1937 = vshrl.u32 %v1936, 7
          %v1938 = vsub.s32 %v1935, %v1937
          %v1939 = vrot.slane %v1931, %v1938
          %v1941 = vunpack.c.l.s4 1983009808
          %v1942 = vunpack.c.0.s8 %v1941
          %v1943 = vlaneseq
          %v1944 = vshrl.u32 %v1943, 7
          %v1945 = vsub.s32 %v1942, %v1944
          %v1946 = vrot.slane %v1932, %v1945
          %v1947 = vcombine.low %v1939, %v1946
          %v1948 = vsel %vm1773, %v1930, %v1930
          %v1949 = vsel %vm1775, %v1930, %v1948
          %v1950 = vrot.slane %v1947, 7
          %v1951 = vsel %vm1698, %v1950, %v1949
          %v1952 = vsel %vm1779, %v1950, %v1951
          %v1953 = vsel %vm1781, %v1950, %v1952
          %v1954 = vsel %vm1783, %v1950, %v1953
          %1956 = vst [vmem:[#allocation5] sm:$0xff] %v1954
        $region48: #{clip_video_spec_forward.1} parent=39 // pred_fallthru
          _
        // Predicated region
        $region49: #{clip_video_spec_forward.1} parent=39 // pred_check
          %p1957 = pneg %p148
        $region50: #{clip_video_spec_forward.1} parent=39 // pred_check_branch
          %1959 = sbr.rel (%p1957) target = $region52
        $region51: #{clip_video_spec_forward.1} parent=39 // pred_region
          %s1961 = ssub.s32 128, 128
          %1962 = vsyncadd [#allocation4], %s1961
          %s1964 = sshll.u32 [#allocation3], 4
          %s1965 = int_to_ptr.vmem [resolvable:$true] %s1964
          %1967 = dma.vmem_to_hbm [thread:$0]  %s1965, 128, %s5, [#allocation4]
        $region52: #{clip_video_spec_forward.1} parent=39 // pred_fallthru
          _
        // Predicated region
        $region53: #{clip_video_spec_forward.1} parent=39 // pred_check
          %p1968 = pneg %p169
        $region54: #{clip_video_spec_forward.1} parent=39 // pred_check_branch
          %1970 = sbr.rel (%p1968) target = $region56
        $region55: #{clip_video_spec_forward.1} parent=39 // pred_region
          %s1972 = ssub.s32 128, 128
          %1973 = vsyncadd [#allocation6], %s1972
          %s1975 = sshll.u32 [#allocation5], 4
          %s1976 = int_to_ptr.vmem [resolvable:$true] %s1975
          %1978 = dma.vmem_to_hbm [thread:$0]  %s1976, 128, %s6, [#allocation6]
        $region56: #{clip_video_spec_forward.1} parent=39 // pred_fallthru
          _
        // Predicated region
        $region57: #{clip_video_spec_forward.1} parent=39 // pred_check
          %p1979 = pneg %p148
        $region58: #{clip_video_spec_forward.1} parent=39 // pred_check_branch
          %1981 = sbr.rel (%p1979) target = $region60
        $region59: #{clip_video_spec_forward.1} parent=39 // pred_region
          %1982 = dma.done [#allocation4], 128
        $region60: #{clip_video_spec_forward.1} parent=39 // pred_fallthru
          _
        // Predicated region
        $region61: #{clip_video_spec_forward.1} parent=39 // pred_check
          %p1983 = pneg %p169
        $region62: #{clip_video_spec_forward.1} parent=39 // pred_check_branch
          %1985 = sbr.rel (%p1983) target = $region64
        $region63: #{clip_video_spec_forward.1} parent=39 // pred_region
          %1986 = dma.done [#allocation6], 128
        $region64: #{clip_video_spec_forward.1} parent=39 // pred_fallthru
          _
      $region40: #{clip_video_spec_forward.1} parent=5 // pred_fallthru
        _
      %p1987 = scmp.le.s32.totalorder 2, %s15
      // Predicated region
      $region65: #{clip_video_spec_forward.1} parent=5 // pred_check
        %p1988 = pneg %p1987
      $region66: #{clip_video_spec_forward.1} parent=5 // pred_check_branch
        %1990 = sbr.rel (%p1988) target = $region68
      $region67: #{clip_video_spec_forward.1} parent=5 // pred_region
        %s1991 = ssub.s32 %s15, 2
      $region68: #{clip_video_spec_forward.1} parent=5 // pred_fallthru
        _
    $region6: #{clip_video_spec_forward.1} parent=1 // loop_footer
      %s19 = sadd.s32 1, %s15
    $region7: #{clip_video_spec_forward.1} parent=1 // loop_footer_branch
      %14 = sbr.rel target = $region3
    $region8: #{clip_video_spec_forward.1} parent=1 // loop_exit
      _
    %1992 = vsyncpa [#allocation4], 1
    %s1993 = scalar_lea.sflag [#allocation4], 1
    %1994 = vsyncpa %s1993, 1
    %1995 = vsyncpa [#allocation6], 1

</llo_original>
